<compile_context>
chip_gen: v5e
topology: v5e:2x2
jax: 0.10.0
libtpu: 0.0.40
codegen_flags: <defaults>
</compile_context>

<pallas_src>
import functools
import math

import jax
import jax.numpy as jnp
from jax.experimental import pallas as pl
from jax.experimental.pallas import tpu as pltpu


NEG_INF = -1e30                      # finite large-negative (safe with exp / casts)

_ROW_CANDS = (1024, 512, 256, 128, 64, 32, 16, 8)   # sublane-side row tiles
_COL_CANDS = (1024, 512, 256, 128)                   # lane-side tiles (128-multiples)
_ATTN_T_CANDS = (512, 256, 128, 64, 32, 16, 8)


# ----------------------------- VMEM budget / tiling -----------------------------

@functools.lru_cache(maxsize=None)
def _vmem_limit_bytes():
    """Per-generation scoped-VMEM limit (~96 MiB on v5e/v6e, ~48 MiB on v7x)."""
    cap = None
    try:
        info = pltpu.get_tpu_info()
        for name in ("vmem_capacity_bytes", "vmem_size_bytes", "vmem_bytes"):
            val = getattr(info, name, None)
            if val:
                cap = int(val)
                break
    except Exception:
        cap = None
    if not cap:
        cap = 64 * 1024 * 1024          # conservative fallback: v7x physical VMEM
    return max(32 * 1024 * 1024, min(cap * 3 // 4, 100 * 1024 * 1024))


def _tile_budget():
    # Leave headroom under the scoped limit for Mosaic-internal scratch.
    return int(_vmem_limit_bytes() * 0.7)


def _cp(sem):
    return pltpu.CompilerParams(dimension_semantics=sem,
                                vmem_limit_bytes=_vmem_limit_bytes())


def _divisors(n, candidates):
    cands = sorted({c for c in candidates if c <= n and n % c == 0}, reverse=True)
    if n not in cands:
        # Full-extent fallback keeps the (8,128) BlockSpec rule for ragged dims.
        # TODO(synk): pad non-128-multiple vocab/hidden dims instead of relying
        # on a full-extent block at very large sizes.
        cands.append(n)
    return cands


def _pick_tiles(n, m, need_fn, budget, row_cands=_ROW_CANDS, col_cands=_COL_CANDS):
    rows = _divisors(n, row_cands)
    cols = _divisors(m, col_cands)
    for tn in rows:
        for tm in cols:
            if need_fn(tn, tm) <= budget:
                return tn, tm
    return min(rows), min(cols)


def _pick_head_group(h, dh):
    # Pack heads per attention grid step so each step moves >=128 lanes worth
    # of work through the MXU (or all heads if that is not reachable).
    hg = 1
    for cand in range(1, h + 1):
        if h % cand == 0:
            hg = cand
            if cand * dh >= 128:
                break
    return hg


def _pick_attn_tiles(h, t, dh, q_isz, o_isz, budget):
    hg = _pick_head_group(h, dh)
    tqs = _divisors(t, _ATTN_T_CANDS)
    for tq in tqs:
        need = (2 * hg * tq * dh * q_isz            # q block (double buffered)
                + 2 * 2 * hg * tq * dh * q_isz      # k + v blocks (tk == tq)
                + 2 * hg * tq * dh * o_isz          # out block
                + hg * tq * dh * q_isz              # scaled-q scratch
                + hg * tq * (dh + 2) * 4)           # acc + m + l scratch
        if need <= budget:
            return hg, tq
    return hg, min(tqs)


# ----------------------------- Pallas kernels -----------------------------

def _norm_linear_kernel(x_ref, lnw_ref, w_ref, o_ref, xn_sc, *, eps, out_scale):
    # Fused RMSNorm + matmul: norm of the row block is computed once (at the
    # first output-column step) into a VMEM scratch and reused.
    @pl.when(pl.program_id(1) == 0)
    def _():
        x = x_ref[...].astype(jnp.float32)
        ms = jnp.mean(x * x, axis=-1, keepdims=True)
        xn_sc[...] = ((x * jax.lax.rsqrt(ms + eps))
                      * lnw_ref[...].astype(jnp.float32)).astype(xn_sc.dtype)

    out = jnp.dot(xn_sc[...], w_ref[...], preferred_element_type=jnp.float32)
    if out_scale != 1.0:
        out = out * out_scale
    o_ref[...] = out.astype(o_ref.dtype)


def _linear_residual_kernel(x_ref, w_ref, r_ref, o_ref, acc_ref, *, res_mult):
    # K-tiled matmul with fused epilogue: out = matmul * res_mult + residual.
    @pl.when(pl.program_id(2) == 0)
    def _():
        acc_ref[...] = jnp.zeros(acc_ref.shape, acc_ref.dtype)

    acc_ref[...] += jnp.dot(x_ref[...], w_ref[...],
                            preferred_element_type=jnp.float32)

    @pl.when(pl.program_id(2) == pl.num_programs(2) - 1)
    def _():
        out = acc_ref[...]
        if res_mult != 1.0:
            out = out * res_mult
        o_ref[...] = (out + r_ref[...].astype(jnp.float32)).astype(o_ref.dtype)


def _glu_kernel(x_ref, lnw_ref, wg1_ref, w2_ref, o_ref, acc_ref, xn_sc,
                *, eps, res_mult):
    # Fused RMSNorm + GatedLinearUnit (swish): out = w2(silu(xn@wg) * (xn@w1))
    # * res_mult + residual, hidden dim tiled, x_ref doubles as the residual.
    @pl.when(pl.program_id(1) == 0)
    def _():
        x = x_ref[...].astype(jnp.float32)
        ms = jnp.mean(x * x, axis=-1, keepdims=True)
        xn_sc[...] = ((x * jax.lax.rsqrt(ms + eps))
                      * lnw_ref[...].astype(jnp.float32)).astype(xn_sc.dtype)
        acc_ref[...] = jnp.zeros(acc_ref.shape, acc_ref.dtype)

    xn = xn_sc[...]
    g = jnp.dot(xn, wg1_ref[0], preferred_element_type=jnp.float32)
    h = jnp.dot(xn, wg1_ref[1], preferred_element_type=jnp.float32)
    a = g * jax.nn.sigmoid(g)                       # swish / SiLU in fp32
    acc_ref[...] += jnp.dot((a * h).astype(w2_ref.dtype), w2_ref[...],
                            preferred_element_type=jnp.float32)

    @pl.when(pl.program_id(1) == pl.num_programs(1) - 1)
    def _():
        out = acc_ref[...]
        if res_mult != 1.0:
            out = out * res_mult
        o_ref[...] = (out + x_ref[...].astype(jnp.float32)).astype(o_ref.dtype)


def _flash_attn_kernel(q_ref, k_ref, v_ref, o_ref, qs_sc, m_sc, l_sc, acc_sc,
                       *, scale):
    # Online-softmax causal attention over KV blocks for one (batch, head
    # group, q block).  Blocks: q (1, Hg, tq, Dh); k/v (1, Hg, tk, Dh), tq==tk.
    qi = pl.program_id(2)
    kvi = pl.program_id(3)

    @pl.when(kvi == 0)
    def _():
        qs_sc[...] = q_ref[0] * scale               # fold scale into q once
        m_sc[...] = jnp.full(m_sc.shape, NEG_INF, m_sc.dtype)
        l_sc[...] = jnp.zeros(l_sc.shape, l_sc.dtype)
        acc_sc[...] = jnp.zeros(acc_sc.shape, acc_sc.dtype)

    def update(s):
        m_new = jnp.maximum(m_sc[...], jnp.max(s, axis=-1, keepdims=True))
        alpha = jnp.exp(m_sc[...] - m_new)
        p = jnp.exp(s - m_new)
        l_sc[...] = alpha * l_sc[...] + jnp.sum(p, axis=-1, keepdims=True)
        acc_sc[...] = alpha * acc_sc[...] + jnp.einsum(
            "hqk,hkd->hqd", p.astype(v_ref.dtype), v_ref[0],
            preferred_element_type=jnp.float32)
        m_sc[...] = m_new

    @pl.when(kvi < qi)        # fully-below-diagonal block: no mask needed
    def _():
        s = jnp.einsum("hqd,hkd->hqk", qs_sc[...], k_ref[0],
                       preferred_element_type=jnp.float32)
        update(s)

    @pl.when(kvi == qi)       # diagonal block: causal mask within block
    def _():
        s = jnp.einsum("hqd,hkd->hqk", qs_sc[...], k_ref[0],
                       preferred_element_type=jnp.float32)
        tq, tk = s.shape[1], s.shape[2]
        rows = jax.lax.broadcasted_iota(jnp.int32, (tq, tk), 0)
        cols = jax.lax.broadcasted_iota(jnp.int32, (tq, tk), 1)
        update(jnp.where((cols <= rows)[None, :, :], s, NEG_INF))

    # kvi > qi: above the diagonal, no compute (and no DMA — see kv_spec clamp).

    @pl.when(kvi == pl.num_programs(3) - 1)
    def _():
        o_ref[0] = (acc_sc[...] *
                    pl.reciprocal(l_sc[...], approx=True)).astype(o_ref.dtype)


# ----------------------------- Pallas wrappers -----------------------------

def pallas_norm_linear(x, lnw, w, *, eps, out_scale=1.0, out_dtype=jnp.float32):
    n, k = x.shape
    m = w.shape[1]
    x_isz, w_isz = x.dtype.itemsize, w.dtype.itemsize
    o_isz = jnp.dtype(out_dtype).itemsize

    def need(tn, tm):
        return (2 * tn * k * x_isz + 2 * k * tm * w_isz + 2 * tn * tm * o_isz
                + tn * k * w_isz + k * 4)

    tn, tm = _pick_tiles(n, m, need, _tile_budget())
    return pl.pallas_call(
        functools.partial(_norm_linear_kernel, eps=eps, out_scale=out_scale),
        out_shape=jax.ShapeDtypeStruct((n, m), out_dtype),
        grid=(n // tn, m // tm),
        in_specs=[pl.BlockSpec((tn, k), lambda i, j: (i, 0)),
                  pl.BlockSpec((1, k), lambda i, j: (0, 0)),
                  pl.BlockSpec((k, tm), lambda i, j: (0, j))],
        out_specs=pl.BlockSpec((tn, tm), lambda i, j: (i, j)),
        scratch_shapes=[pltpu.VMEM((tn, k), w.dtype)],
        compiler_params=_cp(("parallel", "arbitrary")),
    )(x, lnw, w)


def pallas_linear_residual(x, w, residual, *, res_mult=1.0, out_dtype=jnp.float32):
    n, k = x.shape
    m = w.shape[1]
    x_isz, w_isz = x.dtype.itemsize, w.dtype.itemsize
    r_isz = residual.dtype.itemsize
    o_isz = jnp.dtype(out_dtype).itemsize
    tk = _divisors(k, (512, 256, 128))[0]

    def need(tn, tm):
        return (2 * tn * tk * x_isz + 2 * tk * tm * w_isz
                + 2 * tn * tm * r_isz + 2 * tn * tm * o_isz + tn * tm * 4)

    tn, tm = _pick_tiles(n, m, need, _tile_budget())
    return pl.pallas_call(
        functools.partial(_linear_residual_kernel, res_mult=res_mult),
        out_shape=jax.ShapeDtypeStruct((n, m), out_dtype),
        grid=(n // tn, m // tm, k // tk),
        in_specs=[pl.BlockSpec((tn, tk), lambda i, j, kk: (i, kk)),
                  pl.BlockSpec((tk, tm), lambda i, j, kk: (kk, j)),
                  pl.BlockSpec((tn, tm), lambda i, j, kk: (i, j))],
        out_specs=pl.BlockSpec((tn, tm), lambda i, j, kk: (i, j)),
        scratch_shapes=[pltpu.VMEM((tn, tm), jnp.float32)],
        compiler_params=_cp(("parallel", "parallel", "arbitrary")),
    )(x, w, residual)


def pallas_glu(x, lnw, wg1, w2, *, eps, res_mult, out_dtype=jnp.float32):
    n, d = x.shape
    hdim = wg1.shape[2]
    x_isz, w_isz = x.dtype.itemsize, wg1.dtype.itemsize
    o_isz = jnp.dtype(out_dtype).itemsize

    def need(tn, th):
        return (2 * tn * d * x_isz          # x / residual
                + 2 * 2 * d * th * w_isz    # stacked wg/w1
                + 2 * th * d * w_isz        # w2
                + 2 * tn * d * o_isz        # out
                + tn * d * 4                # acc
                + tn * d * w_isz            # xn scratch
                + d * 4)                    # ln weight

    tn, th = _pick_tiles(n, hdim, need, _tile_budget())
    return pl.pallas_call(
        functools.partial(_glu_kernel, eps=eps, res_mult=res_mult),
        out_shape=jax.ShapeDtypeStruct((n, d), out_dtype),
        grid=(n // tn, hdim // th),
        in_specs=[pl.BlockSpec((tn, d), lambda i, hk: (i, 0)),
                  pl.BlockSpec((1, d), lambda i, hk: (0, 0)),
                  pl.BlockSpec((2, d, th), lambda i, hk: (0, 0, hk)),
                  pl.BlockSpec((th, d), lambda i, hk: (hk, 0))],
        out_specs=pl.BlockSpec((tn, d), lambda i, hk: (i, 0)),
        scratch_shapes=[pltpu.VMEM((tn, d), jnp.float32),
                        pltpu.VMEM((tn, d), wg1.dtype)],
        compiler_params=_cp(("parallel", "arbitrary")),
    )(x, lnw, wg1, w2)


def pallas_attention(q, k, v, scale, out_dtype=jnp.float32):
    b, h, t, dh = q.shape
    hg, tq = _pick_attn_tiles(h, t, dh, q.dtype.itemsize,
                              jnp.dtype(out_dtype).itemsize, _tile_budget())
    tk = tq
    grid = (b, h // hg, t // tq, t // tk)
    q_spec = pl.BlockSpec((1, hg, tq, dh), lambda bi, hi, qi, ki: (bi, hi, qi, 0))
    # Clamp the KV block index to the diagonal: blocks above the causal
    # diagonal repeat the previous index, so Pallas skips their DMA entirely.
    kv_spec = pl.BlockSpec(
        (1, hg, tk, dh),
        lambda bi, hi, qi, ki: (bi, hi, jnp.minimum(ki, qi), 0))
    # TODO(synk): on v7x, interleave q blocks across the 2 TensorCores to
    # balance the causal triangle; shape here relies on the batch/head axes.
    return pl.pallas_call(
        functools.partial(_flash_attn_kernel, scale=scale),
        out_shape=jax.ShapeDtypeStruct((b, h, t, dh), out_dtype),
        grid=grid,
        in_specs=[q_spec, kv_spec, kv_spec],
        out_specs=q_spec,
        scratch_shapes=[pltpu.VMEM((hg, tq, dh), q.dtype),     # scaled q
                        pltpu.VMEM((hg, tq, 1), jnp.float32),  # running max
                        pltpu.VMEM((hg, tq, 1), jnp.float32),  # running sum
                        pltpu.VMEM((hg, tq, dh), jnp.float32)],
        compiler_params=_cp(("parallel", "parallel", "parallel", "arbitrary")),
    )(q, k, v)


# ----------------------------- RoPE (glue) -----------------------------

def rope_tables(seq_len, dh, theta):
    inv_freq = 1.0 / (theta ** (jnp.arange(0, dh, 2, dtype=jnp.float32) / dh))
    t = jnp.arange(seq_len, dtype=jnp.float32)
    ang = jnp.outer(t, inv_freq)                    # [T, Dh//2]
    return jnp.cos(ang), jnp.sin(ang)


def apply_rope(x, cos, sin, out_dtype=None):
    # x: [B, H, T, Dh]; interleaved (real, imag) pairs (FMS view_as_complex).
    out_dtype = x.dtype if out_dtype is None else out_dtype
    xf = x.astype(jnp.float32)
    xr = xf.reshape(*xf.shape[:-1], xf.shape[-1] // 2, 2)
    x1 = xr[..., 0]
    x2 = xr[..., 1]
    c = cos[None, None, :, :]
    s = sin[None, None, :, :]
    o1 = x1 * c - x2 * s
    o2 = x1 * s + x2 * c
    return jnp.stack([o1, o2], axis=-1).reshape(x.shape).astype(out_dtype)
    # TODO(synk): fuse RoPE + the head transpose into the attention / a QKV
    # epilogue kernel to remove these XLA-side temporaries.


# ----------------------------- Model forward -----------------------------

def prepare_params(params, cfg, compute_dtype):
    """One-time weight prep OUTSIDE jit: compute-dtype cast + wg/w1 stacking."""
    cd = compute_dtype
    layers = []
    for layer in params["layers"]:
        layers.append(dict(
            ln_w=layer["ln_w"],
            ff_ln_w=layer["ff_ln_w"],
            wqkv=layer["wqkv"].astype(cd),
            wo=layer["wo"].astype(cd),
            wg1=jnp.stack([layer["wg"], layer["w1"]], axis=0).astype(cd),
            w2=layer["w2"].astype(cd),
        ))
    return dict(embedding=params["embedding"],
                dec_norm_w=params["dec_norm_w"],
                head_w_t=params["head_w_t"].astype(cd),
                layers=layers)


def granite_forward(prep, ids, cfg, compute_dtype=jnp.float32):
    B, T = ids.shape
    D = cfg["emb_dim"]
    Hn = cfg["nheads"]
    Dh = D // Hn
    cd = compute_dtype
    eps = cfg["norm_eps"]
    res_mult = cfg["residual_multiplier"]

    x2d = (prep["embedding"][ids] * cfg["embedding_multiplier"]).reshape(B * T, D)
    cos, sin = rope_tables(T, Dh, cfg["rope_theta"])

    for layer in prep["layers"]:
        # ---- attention sub-layer (RMSNorm fused into the QKV projection) ----
        qkv = pallas_norm_linear(x2d, layer["ln_w"], layer["wqkv"],
                                 eps=eps, out_dtype=cd)              # [B*T, 3D]
        q, k, v = jnp.split(qkv, 3, axis=-1)
        q = q.reshape(B, T, Hn, Dh).transpose(0, 2, 1, 3)
        k = k.reshape(B, T, Hn, Dh).transpose(0, 2, 1, 3)
        v = v.reshape(B, T, Hn, Dh).transpose(0, 2, 1, 3)
        q = apply_rope(q, cos, sin, cd)
        k = apply_rope(k, cos, sin, cd)
        attn = pallas_attention(q, k, v, cfg["attention_multiplier"],
                                out_dtype=cd)
        attn2d = attn.transpose(0, 2, 1, 3).reshape(B * T, D)
        x2d = pallas_linear_residual(attn2d, layer["wo"], x2d,
                                     res_mult=res_mult)

        # ---- gated MLP sub-layer (RMSNorm + residual fused into the GLU) ----
        x2d = pallas_glu(x2d, layer["ff_ln_w"], layer["wg1"], layer["w2"],
                         eps=eps, res_mult=res_mult)

    # Final dec_norm fused into the LM head, with 1/logits_scaling epilogue.
    logits = pallas_norm_linear(x2d, prep["dec_norm_w"], prep["head_w_t"],
                                eps=eps, out_scale=1.0 / cfg["logits_scaling"])
    return logits.reshape(B, T, -1)
    # TODO(synk): KV-cache (use_cache=True), dropout (p_dropout=0 here),
    # grouped-query attention (kvheads > 0) and tie_heads are not exercised.


# ----------------------------- Pure-JAX reference -----------------------------

def ref_forward(params, ids, cfg):
    B, T = ids.shape
    D = cfg["emb_dim"]
    Hn = cfg["nheads"]
    Dh = D // Hn

    def rms(x2d, w):
        ms = jnp.mean(x2d * x2d, axis=-1, keepdims=True)
        return x2d * jax.lax.rsqrt(ms + cfg["norm_eps"]) * w

    x = params["embedding"][ids] * cfg["embedding_multiplier"]
    cos, sin = rope_tables(T, Dh, cfg["rope_theta"])

    for layer in params["layers"]:
        residual = x
        xn = rms(x.reshape(B * T, D), layer["ln_w"])
        wqkv = layer["wqkv"]
        q = (xn @ wqkv[:, :D]).reshape(B, T, Hn, Dh).transpose(0, 2, 1, 3)
        k = (xn @ wqkv[:, D:2 * D]).reshape(B, T, Hn, Dh).transpose(0, 2, 1, 3)
        v = (xn @ wqkv[:, 2 * D:]).reshape(B, T, Hn, Dh).transpose(0, 2, 1, 3)
        q = apply_rope(q, cos, sin)
        k = apply_rope(k, cos, sin)
        s = jnp.einsum("bhqd,bhkd->bhqk", q, k) * cfg["attention_multiplier"]
        causal = jnp.tril(jnp.ones((T, T), dtype=bool))
        s = jnp.where(causal[None, None], s, jnp.finfo(jnp.float32).min)
        p = jax.nn.softmax(s, axis=-1)
        attn = jnp.einsum("bhqk,bhkd->bhqd", p, v)
        attn = attn.transpose(0, 2, 1, 3).reshape(B * T, D)
        x = (attn @ layer["wo"]).reshape(B, T, D) * cfg["residual_multiplier"] + residual

        residual = x
        xn = rms(x.reshape(B * T, D), layer["ff_ln_w"])
        g = xn @ layer["wg"]
        h = xn @ layer["w1"]
        ff = ((g * jax.nn.sigmoid(g)) * h) @ layer["w2"]
        x = ff.reshape(B, T, D) * cfg["residual_multiplier"] + residual

    xn = rms(x.reshape(B * T, D), params["dec_norm_w"])
    return (xn @ params["head_w_t"]).reshape(B, T, -1) / cfg["logits_scaling"]


# ----------------------------- Params -----------------------------

def init_params(key, cfg):
    D = cfg["emb_dim"]
    V = cfg["src_vocab_size"]
    H = cfg["hidden_dim"]
    keys = jax.random.split(key, 4 + cfg["nlayers"])
    std = D ** -0.5

    emb = jax.random.normal(keys[0], (V, D), jnp.float32) * std
    emb = emb.at[cfg["pad_id"] % V].set(0.0)        # nn.Embedding padding_idx row
    head_w_t = jax.random.normal(keys[1], (D, V), jnp.float32) * (
        1.0 / math.sqrt(math.sqrt(D * V)))          # pre-transposed LM head
    dec_norm_w = 1.0 + 0.1 * jax.random.normal(keys[2], (1, D), jnp.float32)

    layers = []
    for i in range(cfg["nlayers"]):
        lk = jax.random.split(keys[4 + i], 9)
        wq = jax.random.normal(lk[0], (D, D), jnp.float32) * std
        wk = jax.random.normal(lk[1], (D, D), jnp.float32) * std
        wv = jax.random.normal(lk[2], (D, D), jnp.float32) * std
        layers.append(dict(
            ln_w=1.0 + 0.1 * jax.random.normal(lk[7], (1, D), jnp.float32),
            ff_ln_w=1.0 + 0.1 * jax.random.normal(lk[8], (1, D), jnp.float32),
            wqkv=jnp.concatenate([wq, wk, wv], axis=1),   # fused (D, 3D)
            wo=jax.random.normal(lk[3], (D, D), jnp.float32) * std,
            wg=jax.random.normal(lk[4], (D, H), jnp.float32) * std,
            w1=jax.random.normal(lk[5], (D, H), jnp.float32) * std,
            w2=jax.random.normal(lk[6], (H, D), jnp.float32) * (H ** -0.5),
        ))
    return dict(embedding=emb, head_w_t=head_w_t, dec_norm_w=dec_norm_w,
                layers=layers)


# ----------------------------- Main -----------------------------

if __name__ == "__main__":
    # Small Granite config (defaults shrunk; Granite-3-style multipliers to
    # exercise the scaling semantics).
    cfg = dict(
        src_vocab_size=256,
        emb_dim=64,
        norm_eps=1e-5,
        nheads=4,
        kvheads=0,                      # 0 -> same as nheads (MHA)
        nlayers=2,
        pad_id=-1,
        hidden_grow_factor=8 / 3,
        multiple_of=32,
        rope_theta=10000.0,
        embedding_multiplier=12.0,
        logits_scaling=8.0,
        residual_multiplier=0.22,
        attention_multiplier=0.25,      # passed as SDPA `scale` in FMS MHA
    )
    cfg["hidden_dim"] = int(
        cfg["multiple_of"]
        * math.ceil(cfg["emb_dim"] * cfg["hidden_grow_factor"] / cfg["multiple_of"]))

    key = jax.random.PRNGKey(0)
    pkey, ikey = jax.random.split(key)
    params = init_params(pkey, cfg)

    B, T = 2, 8
    ids = jax.random.randint(ikey, (B, T), 0, cfg["src_vocab_size"] - 1,
                             dtype=jnp.int32)

    # Weight prep (dtype cast + wg/w1 stacking) happens ONCE outside jit.
    prep_f32 = prepare_params(params, cfg, jnp.float32)
    prep_bf16 = prepare_params(params, cfg, jnp.bfloat16)

    fwd_f32 = jax.jit(lambda p, i: granite_forward(p, i, cfg, jnp.float32))
    fwd_bf16 = jax.jit(lambda p, i: granite_forward(p, i, cfg, jnp.bfloat16))

    logits = fwd_f32(prep_f32, ids)
    jax.block_until_ready(logits)

    ref = ref_forward(params, ids, cfg)
    assert logits.shape == (B, T, cfg["src_vocab_size"])
    assert bool(jnp.allclose(logits, ref, rtol=1e-2, atol=1e-2)), \
        "mismatch vs fp32 reference"

    # bf16 MXU-input path (recommended on v6e/v7x); fp32 accumulation keeps it
    # close to the fp32 reference.
    logits_bf16 = fwd_bf16(prep_bf16, ids)
    jax.block_until_ready(logits_bf16)
    rel = float(jnp.max(jnp.abs(logits_bf16.astype(jnp.float32) - ref))
                / (float(jnp.max(jnp.abs(ref))) + 1e-6))
    assert rel < 0.1, f"bf16 path diverged: rel={rel}"

    print("KERNEL_OK")
</pallas_src>

<mosaic_0001>
module attributes {stable_mosaic.version = 11 : i64} {
  func.func @_norm_linear_kernel(%arg0: i32, %arg1: i32, %arg2: memref<16x64xf32, #tpu.memory_space<vmem>>, %arg3: memref<1x64xf32, #tpu.memory_space<vmem>>, %arg4: memref<64x192xf32, #tpu.memory_space<vmem>>, %arg5: memref<16x192xf32, #tpu.memory_space<vmem>>, %arg6: memref<16x64xf32, #tpu.memory_space<vmem>>) attributes {dimension_semantics = [#tpu.dimension_semantics<parallel>, #tpu.dimension_semantics<arbitrary>], iteration_bounds = array<i64: 1, 1>, scalar_prefetch = 0 : i64, scratch_operands = 1 : i64, tpu.core_type = #tpu.core_type<tc>, window_params = [{transform_indices = @transform_0, window_bounds = array<i64: 16, 64>}, {pipeline_mode = #tpu.pipeline_mode<synchronous>, transform_indices = @transform_1, window_bounds = array<i64: 1, 64>}, {transform_indices = @transform_2, window_bounds = array<i64: 64, 192>}, {transform_indices = @transform_3, window_bounds = array<i64: 16, 192>}]} {
    %c0_i32 = arith.constant 0 : i32
    %0 = arith.cmpi eq, %arg1, %c0_i32 : i32
    %1 = arith.extui %0 : i1 to i32
    %c0_i32_0 = arith.constant 0 : i32
    %2 = arith.cmpi ne, %1, %c0_i32_0 : i32
    scf.if %2 {
      %c0_6 = arith.constant 0 : index
      %c0_7 = arith.constant 0 : index
      %7 = vector.load %arg2[%c0_6, %c0_7] : memref<16x64xf32, #tpu.memory_space<vmem>>, vector<16x64xf32>
      %8 = arith.mulf %7, %7 : vector<16x64xf32>
      %cst_8 = arith.constant dense<0.000000e+00> : vector<16xf32>
      %9 = vector.multi_reduction <add>, %8, %cst_8 [1] : vector<16x64xf32> to vector<16xf32>
      %10 = vector.shape_cast %9 : vector<16xf32> to vector<16x1xf32>
      %cst_9 = arith.constant 6.400000e+01 : f32
      %11 = vector.broadcast %cst_9 : f32 to vector<16x1xf32>
      %12 = arith.divf %10, %11 : vector<16x1xf32>
      %cst_10 = arith.constant 9.99999974E-6 : f32
      %13 = vector.broadcast %cst_10 : f32 to vector<16x1xf32>
      %14 = arith.addf %12, %13 : vector<16x1xf32>
      %15 = math.rsqrt %14 : vector<16x1xf32>
      %16 = vector.broadcast %15 : vector<16x1xf32> to vector<16x64xf32>
      %17 = arith.mulf %7, %16 : vector<16x64xf32>
      %c0_11 = arith.constant 0 : index
      %c0_12 = arith.constant 0 : index
      %18 = vector.load %arg3[%c0_11, %c0_12] : memref<1x64xf32, #tpu.memory_space<vmem>>, vector<1x64xf32>
      %19 = vector.broadcast %18 : vector<1x64xf32> to vector<16x64xf32>
      %20 = arith.mulf %17, %19 : vector<16x64xf32>
      %c0_13 = arith.constant 0 : index
      %c0_14 = arith.constant 0 : index
      %21 = vector.load %arg6[%c0_13, %c0_14] : memref<16x64xf32, #tpu.memory_space<vmem>>, vector<16x64xf32>
      tpu.vector_store %arg6[%c0_13, %c0_14], %20 {strides = array<i32>} : memref<16x64xf32, #tpu.memory_space<vmem>>, vector<16x64xf32>,
    } else {
    }
    %c0 = arith.constant 0 : index
    %c0_1 = arith.constant 0 : index
    %3 = vector.load %arg6[%c0, %c0_1] : memref<16x64xf32, #tpu.memory_space<vmem>>, vector<16x64xf32>
    %c0_2 = arith.constant 0 : index
    %c0_3 = arith.constant 0 : index
    %4 = vector.load %arg4[%c0_2, %c0_3] : memref<64x192xf32, #tpu.memory_space<vmem>>, vector<64x192xf32>
    %cst = arith.constant dense<0.000000e+00> : vector<16x192xf32>
    %5 = tpu.matmul %3, %4, %cst {dimension_numbers = #tpu.dot_dimension_numbers<[1], [0], [0], [1], [0, 0, 1, 1], [], []>} : vector<16x64xf32>, vector<64x192xf32>, vector<16x192xf32> -> vector<16x192xf32>
    %c0_4 = arith.constant 0 : index
    %c0_5 = arith.constant 0 : index
    %6 = vector.load %arg5[%c0_4, %c0_5] : memref<16x192xf32, #tpu.memory_space<vmem>>, vector<16x192xf32>
    tpu.vector_store %arg5[%c0_4, %c0_5], %5 {strides = array<i32>} : memref<16x192xf32, #tpu.memory_space<vmem>>, vector<16x192xf32>,
    return
  }
  func.func @transform_0(%arg0: i32, %arg1: i32) -> (i32, i32) {
    %c0_i32 = arith.constant 0 : i32
    %c0_i32_0 = arith.constant 0 : i32
    return %arg0, %c0_i32 : i32, i32
  }
  func.func @transform_1(%arg0: i32, %arg1: i32) -> (i32, i32) {
    %c0_i32 = arith.constant 0 : i32
    %c0_i32_0 = arith.constant 0 : i32
    %c0_i32_1 = arith.constant 0 : i32
    return %c0_i32, %c0_i32_0 : i32, i32
  }
  func.func @transform_2(%arg0: i32, %arg1: i32) -> (i32, i32) {
    %c0_i32 = arith.constant 0 : i32
    %c0_i32_0 = arith.constant 0 : i32
    return %c0_i32, %arg1 : i32, i32
  }
  func.func @transform_3(%arg0: i32, %arg1: i32) -> (i32, i32) {
    %c0_i32 = arith.constant 0 : i32
    return %arg0, %arg1 : i32, i32
  }
}

module attributes {stable_mosaic.version = 11 : i64} {
  func.func @_flash_attn_kernel(%arg0: i32, %arg1: i32, %arg2: i32, %arg3: i32, %arg4: memref<1x4x8x16xf32, #tpu.memory_space<vmem>>, %arg5: memref<1x4x8x16xf32, #tpu.memory_space<vmem>>, %arg6: memref<1x4x8x16xf32, #tpu.memory_space<vmem>>, %arg7: memref<1x4x8x16xf32, #tpu.memory_space<vmem>>, %arg8: memref<4x8x16xf32, #tpu.memory_space<vmem>>, %arg9: memref<4x8x1xf32, #tpu.memory_space<vmem>>, %arg10: memref<4x8x1xf32, #tpu.memory_space<vmem>>, %arg11: memref<4x8x16xf32, #tpu.memory_space<vmem>>) attributes {dimension_semantics = [#tpu.dimension_semantics<parallel>, #tpu.dimension_semantics<parallel>, #tpu.dimension_semantics<parallel>, #tpu.dimension_semantics<arbitrary>], iteration_bounds = array<i64: 2, 1, 1, 1>, scalar_prefetch = 0 : i64, scratch_operands = 4 : i64, tpu.core_type = #tpu.core_type<tc>, window_params = [{transform_indices = @transform_0, window_bounds = array<i64: 1, 4, 8, 16>}, {transform_indices = @transform_1, window_bounds = array<i64: 1, 4, 8, 16>}, {transform_indices = @transform_2, window_bounds = array<i64: 1, 4, 8, 16>}, {transform_indices = @transform_3, window_bounds = array<i64: 1, 4, 8, 16>}]} {
    %c0_i32 = arith.constant 0 : i32
    %0 = arith.cmpi eq, %arg3, %c0_i32 : i32
    %1 = arith.extui %0 : i1 to i32
    %c0_i32_0 = arith.constant 0 : i32
    %2 = arith.cmpi ne, %1, %c0_i32_0 : i32
    scf.if %2 {
      %c0 = arith.constant 0 : index
      %c0_5 = arith.constant 0 : index
      %c0_6 = arith.constant 0 : index
      %c0_7 = arith.constant 0 : index
      %12 = vector.load %arg4[%c0, %c0_5, %c0_6, %c0_7] : memref<1x4x8x16xf32, #tpu.memory_space<vmem>>, vector<1x4x8x16xf32>
      %13 = vector.shape_cast %12 : vector<1x4x8x16xf32> to vector<4x8x16xf32>
      %cst = arith.constant 2.500000e-01 : f32
      %14 = vector.broadcast %cst : f32 to vector<4x8x16xf32>
      %15 = arith.mulf %13, %14 : vector<4x8x16xf32>
      %c0_8 = arith.constant 0 : index
      %c0_9 = arith.constant 0 : index
      %c0_10 = arith.constant 0 : index
      %16 = vector.load %arg8[%c0_8, %c0_9, %c0_10] : memref<4x8x16xf32, #tpu.memory_space<vmem>>, vector<4x8x16xf32>
      tpu.vector_store %arg8[%c0_8, %c0_9, %c0_10], %15 {strides = array<i32>} : memref<4x8x16xf32, #tpu.memory_space<vmem>>, vector<4x8x16xf32>,
      %cst_11 = arith.constant -1.000000e+30 : f32
      %17 = vector.broadcast %cst_11 : f32 to vector<4x8x1xf32>
      %c0_12 = arith.constant 0 : index
      %c0_13 = arith.constant 0 : index
      %c0_14 = arith.constant 0 : index
      %18 = vector.load %arg9[%c0_12, %c0_13, %c0_14] : memref<4x8x1xf32, #tpu.memory_space<vmem>>, vector<4x8x1xf32>
      tpu.vector_store %arg9[%c0_12, %c0_13, %c0_14], %17 {strides = array<i32>} : memref<4x8x1xf32, #tpu.memory_space<vmem>>, vector<4x8x1xf32>,
      %cst_15 = arith.constant 0.000000e+00 : f32
      %19 = vector.broadcast %cst_15 : f32 to vector<4x8x1xf32>
      %c0_16 = arith.constant 0 : index
      %c0_17 = arith.constant 0 : index
      %c0_18 = arith.constant 0 : index
      %20 = vector.load %arg10[%c0_16, %c0_17, %c0_18] : memref<4x8x1xf32, #tpu.memory_space<vmem>>, vector<4x8x1xf32>
      tpu.vector_store %arg10[%c0_16, %c0_17, %c0_18], %19 {strides = array<i32>} : memref<4x8x1xf32, #tpu.memory_space<vmem>>, vector<4x8x1xf32>,
      %cst_19 = arith.constant 0.000000e+00 : f32
      %21 = vector.broadcast %cst_19 : f32 to vector<4x8x16xf32>
      %c0_20 = arith.constant 0 : index
      %c0_21 = arith.constant 0 : index
      %c0_22 = arith.constant 0 : index
      %22 = vector.load %arg11[%c0_20, %c0_21, %c0_22] : memref<4x8x16xf32, #tpu.memory_space<vmem>>, vector<4x8x16xf32>
      tpu.vector_store %arg11[%c0_20, %c0_21, %c0_22], %21 {strides = array<i32>} : memref<4x8x16xf32, #tpu.memory_space<vmem>>, vector<4x8x16xf32>,
    } else {
    }
    %3 = arith.cmpi slt, %arg3, %arg2 : i32
    %4 = arith.extui %3 : i1 to i32
    %c0_i32_1 = arith.constant 0 : i32
    %5 = arith.cmpi ne, %4, %c0_i32_1 : i32
    scf.if %5 {
      %c0 = arith.constant 0 : index
      %c0_5 = arith.constant 0 : index
      %c0_6 = arith.constant 0 : index
      %12 = vector.load %arg8[%c0, %c0_5, %c0_6] : memref<4x8x16xf32, #tpu.memory_space<vmem>>, vector<4x8x16xf32>
      %c0_7 = arith.constant 0 : index
      %c0_8 = arith.constant 0 : index
      %c0_9 = arith.constant 0 : index
      %c0_10 = arith.constant 0 : index
      %13 = vector.load %arg5[%c0_7, %c0_8, %c0_9, %c0_10] : memref<1x4x8x16xf32, #tpu.memory_space<vmem>>, vector<1x4x8x16xf32>
      %14 = vector.shape_cast %13 : vector<1x4x8x16xf32> to vector<4x8x16xf32>
      "tpu.trace_start"() <{level = 10 : i32, message = "hqd,hkd->hqk"}> : () -> ()
      %cst = arith.constant dense<0.000000e+00> : vector<4x8x8xf32>
      %15 = tpu.matmul %12, %14, %cst {dimension_numbers = #tpu.dot_dimension_numbers<[2], [2], [1], [1], [0, 0, 0, 1, 1, 1], [0], [0]>} : vector<4x8x16xf32>, vector<4x8x16xf32>, vector<4x8x8xf32> -> vector<4x8x8xf32>
      "tpu.trace_stop"() : () -> ()
      %c0_11 = arith.constant 0 : index
      %c0_12 = arith.constant 0 : index
      %c0_13 = arith.constant 0 : index
      %16 = vector.load %arg9[%c0_11, %c0_12, %c0_13] : memref<4x8x1xf32, #tpu.memory_space<vmem>>, vector<4x8x1xf32>
      %cst_14 = arith.constant dense<0xFF800000> : vector<4x8xf32>
      %17 = vector.multi_reduction <maximumf>, %15, %cst_14 [2] : vector<4x8x8xf32> to vector<4x8xf32>
      %18 = vector.shape_cast %17 : vector<4x8xf32> to vector<4x8x1xf32>
      %19 = arith.maximumf %16, %18 : vector<4x8x1xf32>
      %c0_15 = arith.constant 0 : index
      %c0_16 = arith.constant 0 : index
      %c0_17 = arith.constant 0 : index
      %20 = vector.load %arg9[%c0_15, %c0_16, %c0_17] : memref<4x8x1xf32, #tpu.memory_space<vmem>>, vector<4x8x1xf32>
      %21 = arith.subf %20, %19 : vector<4x8x1xf32>
      %22 = math.exp %21 : vector<4x8x1xf32>
      %23 = vector.broadcast %19 : vector<4x8x1xf32> to vector<4x8x8xf32>
      %24 = arith.subf %15, %23 : vector<4x8x8xf32>
      %25 = math.exp %24 : vector<4x8x8xf32>
      %c0_18 = arith.constant 0 : index
      %c0_19 = arith.constant 0 : index
      %c0_20 = arith.constant 0 : index
      %26 = vector.load %arg10[%c0_18, %c0_19, %c0_20] : memref<4x8x1xf32, #tpu.memory_space<vmem>>, vector<4x8x1xf32>
      %27 = arith.mulf %22, %26 : vector<4x8x1xf32>
      %cst_21 = arith.constant dense<0.000000e+00> : vector<4x8xf32>
      %28 = vector.multi_reduction <add>, %25, %cst_21 [2] : vector<4x8x8xf32> to vector<4x8xf32>
      %29 = vector.shape_cast %28 : vector<4x8xf32> to vector<4x8x1xf32>
      %30 = arith.addf %27, %29 : vector<4x8x1xf32>
      %c0_22 = arith.constant 0 : index
      %c0_23 = arith.constant 0 : index
      %c0_24 = arith.constant 0 : index
      %31 = vector.load %arg10[%c0_22, %c0_23, %c0_24] : memref<4x8x1xf32, #tpu.memory_space<vmem>>, vector<4x8x1xf32>
      tpu.vector_store %arg10[%c0_22, %c0_23, %c0_24], %30 {strides = array<i32>} : memref<4x8x1xf32, #tpu.memory_space<vmem>>, vector<4x8x1xf32>,
      %c0_25 = arith.constant 0 : index
      %c0_26 = arith.constant 0 : index
      %c0_27 = arith.constant 0 : index
      %32 = vector.load %arg11[%c0_25, %c0_26, %c0_27] : memref<4x8x16xf32, #tpu.memory_space<vmem>>, vector<4x8x16xf32>
      %33 = vector.broadcast %22 : vector<4x8x1xf32> to vector<4x8x16xf32>
      %34 = arith.mulf %33, %32 : vector<4x8x16xf32>
      %c0_28 = arith.constant 0 : index
      %c0_29 = arith.constant 0 : index
      %c0_30 = arith.constant 0 : index
      %c0_31 = arith.constant 0 : index
      %35 = vector.load %arg6[%c0_28, %c0_29, %c0_30, %c0_31] : memref<1x4x8x16xf32, #tpu.memory_space<vmem>>, vector<1x4x8x16xf32>
      %36 = vector.shape_cast %35 : vector<1x4x8x16xf32> to vector<4x8x16xf32>
      "tpu.trace_start"() <{level = 10 : i32, message = "hqk,hkd->hqd"}> : () -> ()
      %cst_32 = arith.constant dense<0.000000e+00> : vector<4x8x16xf32>
      %37 = tpu.matmul %25, %36, %cst_32 {dimension_numbers = #tpu.dot_dimension_numbers<[2], [1], [1], [2], [0, 0, 0, 1, 1, 2], [0], [0]>} : vector<4x8x8xf32>, vector<4x8x16xf32>, vector<4x8x16xf32> -> vector<4x8x16xf32>
      "tpu.trace_stop"() : () -> ()
      %38 = arith.addf %34, %37 : vector<4x8x16xf32>
      %c0_33 = arith.constant 0 : index
      %c0_34 = arith.constant 0 : index
      %c0_35 = arith.constant 0 : index
      %39 = vector.load %arg11[%c0_33, %c0_34, %c0_35] : memref<4x8x16xf32, #tpu.memory_space<vmem>>, vector<4x8x16xf32>
      tpu.vector_store %arg11[%c0_33, %c0_34, %c0_35], %38 {strides = array<i32>} : memref<4x8x16xf32, #tpu.memory_space<vmem>>, vector<4x8x16xf32>,
      %c0_36 = arith.constant 0 : index
      %c0_37 = arith.constant 0 : index
      %c0_38 = arith.constant 0 : index
      %40 = vector.load %arg9[%c0_36, %c0_37, %c0_38] : memref<4x8x1xf32, #tpu.memory_space<vmem>>, vector<4x8x1xf32>
      tpu.vector_store %arg9[%c0_36, %c0_37, %c0_38], %19 {strides = array<i32>} : memref<4x8x1xf32, #tpu.memory_space<vmem>>, vector<4x8x1xf32>,
    } else {
    }
    %6 = arith.cmpi eq, %arg3, %arg2 : i32
    %7 = arith.extui %6 : i1 to i32
    %c0_i32_2 = arith.constant 0 : i32
    %8 = arith.cmpi ne, %7, %c0_i32_2 : i32
    scf.if %8 {
      %c0 = arith.constant 0 : index
      %c0_5 = arith.constant 0 : index
      %c0_6 = arith.constant 0 : index
      %12 = vector.load %arg8[%c0, %c0_5, %c0_6] : memref<4x8x16xf32, #tpu.memory_space<vmem>>, vector<4x8x16xf32>
      %c0_7 = arith.constant 0 : index
      %c0_8 = arith.constant 0 : index
      %c0_9 = arith.constant 0 : index
      %c0_10 = arith.constant 0 : index
      %13 = vector.load %arg5[%c0_7, %c0_8, %c0_9, %c0_10] : memref<1x4x8x16xf32, #tpu.memory_space<vmem>>, vector<1x4x8x16xf32>
      %14 = vector.shape_cast %13 : vector<1x4x8x16xf32> to vector<4x8x16xf32>
      "tpu.trace_start"() <{level = 10 : i32, message = "hqd,hkd->hqk"}> : () -> ()
      %cst = arith.constant dense<0.000000e+00> : vector<4x8x8xf32>
      %15 = tpu.matmul %12, %14, %cst {dimension_numbers = #tpu.dot_dimension_numbers<[2], [2], [1], [1], [0, 0, 0, 1, 1, 1], [0], [0]>} : vector<4x8x16xf32>, vector<4x8x16xf32>, vector<4x8x8xf32> -> vector<4x8x8xf32>
      "tpu.trace_stop"() : () -> ()
      %16 = tpu.iota {dimensions = array<i32: 0>} : vector<8x8xi32>
      %17 = tpu.iota {dimensions = array<i32: 1>} : vector<8x8xi32>
      %18 = arith.cmpi sle, %17, %16 : vector<8x8xi32>
      %19 = vector.shape_cast %18 : vector<8x8xi1> to vector<1x8x8xi1>
      %cst_11 = arith.constant -1.000000e+30 : f32
      %20 = vector.shape_cast %19 : vector<1x8x8xi1> to vector<1x8x8xi1>
      %21 = vector.broadcast %20 : vector<1x8x8xi1> to vector<4x8x8xi1>
      %22 = vector.broadcast %cst_11 : f32 to vector<4x8x8xf32>
      %23 = arith.select %21, %15, %22 : vector<4x8x8xi1>, vector<4x8x8xf32>
      %c0_12 = arith.constant 0 : index
      %c0_13 = arith.constant 0 : index
      %c0_14 = arith.constant 0 : index
      %24 = vector.load %arg9[%c0_12, %c0_13, %c0_14] : memref<4x8x1xf32, #tpu.memory_space<vmem>>, vector<4x8x1xf32>
      %cst_15 = arith.constant dense<0xFF800000> : vector<4x8xf32>
      %25 = vector.multi_reduction <maximumf>, %23, %cst_15 [2] : vector<4x8x8xf32> to vector<4x8xf32>
      %26 = vector.shape_cast %25 : vector<4x8xf32> to vector<4x8x1xf32>
      %27 = arith.maximumf %24, %26 : vector<4x8x1xf32>
      %c0_16 = arith.constant 0 : index
      %c0_17 = arith.constant 0 : index
      %c0_18 = arith.constant 0 : index
      %28 = vector.load %arg9[%c0_16, %c0_17, %c0_18] : memref<4x8x1xf32, #tpu.memory_space<vmem>>, vector<4x8x1xf32>
      %29 = arith.subf %28, %27 : vector<4x8x1xf32>
      %30 = math.exp %29 : vector<4x8x1xf32>
      %31 = vector.broadcast %27 : vector<4x8x1xf32> to vector<4x8x8xf32>
      %32 = arith.subf %23, %31 : vector<4x8x8xf32>
      %33 = math.exp %32 : vector<4x8x8xf32>
      %c0_19 = arith.constant 0 : index
      %c0_20 = arith.constant 0 : index
      %c0_21 = arith.constant 0 : index
      %34 = vector.load %arg10[%c0_19, %c0_20, %c0_21] : memref<4x8x1xf32, #tpu.memory_space<vmem>>, vector<4x8x1xf32>
      %35 = arith.mulf %30, %34 : vector<4x8x1xf32>
      %cst_22 = arith.constant dense<0.000000e+00> : vector<4x8xf32>
      %36 = vector.multi_reduction <add>, %33, %cst_22 [2] : vector<4x8x8xf32> to vector<4x8xf32>
      %37 = vector.shape_cast %36 : vector<4x8xf32> to vector<4x8x1xf32>
      %38 = arith.addf %35, %37 : vector<4x8x1xf32>
      %c0_23 = arith.constant 0 : index
      %c0_24 = arith.constant 0 : index
      %c0_25 = arith.constant 0 : index
      %39 = vector.load %arg10[%c0_23, %c0_24, %c0_25] : memref<4x8x1xf32, #tpu.memory_space<vmem>>, vector<4x8x1xf32>
      tpu.vector_store %arg10[%c0_23, %c0_24, %c0_25], %38 {strides = array<i32>} : memref<4x8x1xf32, #tpu.memory_space<vmem>>, vector<4x8x1xf32>,
      %c0_26 = arith.constant 0 : index
      %c0_27 = arith.constant 0 : index
      %c0_28 = arith.constant 0 : index
      %40 = vector.load %arg11[%c0_26, %c0_27, %c0_28] : memref<4x8x16xf32, #tpu.memory_space<vmem>>, vector<4x8x16xf32>
      %41 = vector.broadcast %30 : vector<4x8x1xf32> to vector<4x8x16xf32>
      %42 = arith.mulf %41, %40 : vector<4x8x16xf32>
      %c0_29 = arith.constant 0 : index
      %c0_30 = arith.constant 0 : index
      %c0_31 = arith.constant 0 : index
      %c0_32 = arith.constant 0 : index
      %43 = vector.load %arg6[%c0_29, %c0_30, %c0_31, %c0_32] : memref<1x4x8x16xf32, #tpu.memory_space<vmem>>, vector<1x4x8x16xf32>
      %44 = vector.shape_cast %43 : vector<1x4x8x16xf32> to vector<4x8x16xf32>
      "tpu.trace_start"() <{level = 10 : i32, message = "hqk,hkd->hqd"}> : () -> ()
      %cst_33 = arith.constant dense<0.000000e+00> : vector<4x8x16xf32>
      %45 = tpu.matmul %33, %44, %cst_33 {dimension_numbers = #tpu.dot_dimension_numbers<[2], [1], [1], [2], [0, 0, 0, 1, 1, 2], [0], [0]>} : vector<4x8x8xf32>, vector<4x8x16xf32>, vector<4x8x16xf32> -> vector<4x8x16xf32>
      "tpu.trace_stop"() : () -> ()
      %46 = arith.addf %42, %45 : vector<4x8x16xf32>
      %c0_34 = arith.constant 0 : index
      %c0_35 = arith.constant 0 : index
      %c0_36 = arith.constant 0 : index
      %47 = vector.load %arg11[%c0_34, %c0_35, %c0_36] : memref<4x8x16xf32, #tpu.memory_space<vmem>>, vector<4x8x16xf32>
      tpu.vector_store %arg11[%c0_34, %c0_35, %c0_36], %46 {strides = array<i32>} : memref<4x8x16xf32, #tpu.memory_space<vmem>>, vector<4x8x16xf32>,
      %c0_37 = arith.constant 0 : index
      %c0_38 = arith.constant 0 : index
      %c0_39 = arith.constant 0 : index
      %48 = vector.load %arg9[%c0_37, %c0_38, %c0_39] : memref<4x8x1xf32, #tpu.memory_space<vmem>>, vector<4x8x1xf32>
      tpu.vector_store %arg9[%c0_37, %c0_38, %c0_39], %27 {strides = array<i32>} : memref<4x8x1xf32, #tpu.memory_space<vmem>>, vector<4x8x1xf32>,
    } else {
    }
    %c0_i32_3 = arith.constant 0 : i32
    %9 = arith.cmpi eq, %arg3, %c0_i32_3 : i32
    %10 = arith.extui %9 : i1 to i32
    %c0_i32_4 = arith.constant 0 : i32
    %11 = arith.cmpi ne, %10, %c0_i32_4 : i32
    scf.if %11 {
      %c0 = arith.constant 0 : index
      %c0_5 = arith.constant 0 : index
      %c0_6 = arith.constant 0 : index
      %12 = vector.load %arg11[%c0, %c0_5, %c0_6] : memref<4x8x16xf32, #tpu.memory_space<vmem>>, vector<4x8x16xf32>
      %c0_7 = arith.constant 0 : index
      %c0_8 = arith.constant 0 : index
      %c0_9 = arith.constant 0 : index
      %13 = vector.load %arg10[%c0_7, %c0_8, %c0_9] : memref<4x8x1xf32, #tpu.memory_space<vmem>>, vector<4x8x1xf32>
      %14 = tpu.reciprocal %13 {approx = true} : vector<4x8x1xf32> -> vector<4x8x1xf32>
      %15 = vector.broadcast %14 : vector<4x8x1xf32> to vector<4x8x16xf32>
      %16 = arith.mulf %12, %15 : vector<4x8x16xf32>
      %c0_10 = arith.constant 0 : index
      %c0_11 = arith.constant 0 : index
      %c0_12 = arith.constant 0 : index
      %c0_13 = arith.constant 0 : index
      %17 = vector.load %arg7[%c0_10, %c0_11, %c0_12, %c0_13] : memref<1x4x8x16xf32, #tpu.memory_space<vmem>>, vector<1x4x8x16xf32>
      %18 = vector.shape_cast %17 : vector<1x4x8x16xf32> to vector<4x8x16xf32>
      %19 = vector.shape_cast %16 : vector<4x8x16xf32> to vector<1x4x8x16xf32>
      tpu.vector_store %arg7[%c0_10, %c0_11, %c0_12, %c0_13], %19 {strides = array<i32>} : memref<1x4x8x16xf32, #tpu.memory_space<vmem>>, vector<1x4x8x16xf32>,
    } else {
    }
    return
  }
  func.func @transform_0(%arg0: i32, %arg1: i32, %arg2: i32, %arg3: i32) -> (i32, i32, i32, i32) {
    %c0_i32 = arith.constant 0 : i32
    %c0_i32_0 = arith.constant 0 : i32
    return %arg0, %arg1, %arg2, %c0_i32 : i32, i32, i32, i32
  }
  func.func @transform_1(%arg0: i32, %arg1: i32, %arg2: i32, %arg3: i32) -> (i32, i32, i32, i32) {
    %0 = arith.minsi %arg3, %arg2 : i32
    %c0_i32 = arith.constant 0 : i32
    %c0_i32_0 = arith.constant 0 : i32
    return %arg0, %arg1, %0, %c0_i32 : i32, i32, i32, i32
  }
  func.func @transform_2(%arg0: i32, %arg1: i32, %arg2: i32, %arg3: i32) -> (i32, i32, i32, i32) {
    %0 = arith.minsi %arg3, %arg2 : i32
    %c0_i32 = arith.constant 0 : i32
    %c0_i32_0 = arith.constant 0 : i32
    return %arg0, %arg1, %0, %c0_i32 : i32, i32, i32, i32
  }
  func.func @transform_3(%arg0: i32, %arg1: i32, %arg2: i32, %arg3: i32) -> (i32, i32, i32, i32) {
    %c0_i32 = arith.constant 0 : i32
    %c0_i32_0 = arith.constant 0 : i32
    return %arg0, %arg1, %arg2, %c0_i32 : i32, i32, i32, i32
  }
}

module attributes {stable_mosaic.version = 11 : i64} {
  func.func @_linear_residual_kernel(%arg0: i32, %arg1: i32, %arg2: i32, %arg3: memref<16x64xf32, #tpu.memory_space<vmem>>, %arg4: memref<64x64xf32, #tpu.memory_space<vmem>>, %arg5: memref<16x64xf32, #tpu.memory_space<vmem>>, %arg6: memref<16x64xf32, #tpu.memory_space<vmem>>, %arg7: memref<16x64xf32, #tpu.memory_space<vmem>>) attributes {dimension_semantics = [#tpu.dimension_semantics<parallel>, #tpu.dimension_semantics<parallel>, #tpu.dimension_semantics<arbitrary>], iteration_bounds = array<i64: 1, 1, 1>, scalar_prefetch = 0 : i64, scratch_operands = 1 : i64, tpu.core_type = #tpu.core_type<tc>, window_params = [{transform_indices = @transform_0, window_bounds = array<i64: 16, 64>}, {transform_indices = @transform_1, window_bounds = array<i64: 64, 64>}, {transform_indices = @transform_2, window_bounds = array<i64: 16, 64>}, {transform_indices = @transform_3, window_bounds = array<i64: 16, 64>}]} {
    %c0_i32 = arith.constant 0 : i32
    %0 = arith.cmpi eq, %arg2, %c0_i32 : i32
    %1 = arith.extui %0 : i1 to i32
    %c0_i32_0 = arith.constant 0 : i32
    %2 = arith.cmpi ne, %1, %c0_i32_0 : i32
    scf.if %2 {
      %cst_10 = arith.constant 0.000000e+00 : f32
      %12 = vector.broadcast %cst_10 : f32 to vector<16x64xf32>
      %c0_11 = arith.constant 0 : index
      %c0_12 = arith.constant 0 : index
      %13 = vector.load %arg7[%c0_11, %c0_12] : memref<16x64xf32, #tpu.memory_space<vmem>>, vector<16x64xf32>
      tpu.vector_store %arg7[%c0_11, %c0_12], %12 {strides = array<i32>} : memref<16x64xf32, #tpu.memory_space<vmem>>, vector<16x64xf32>,
    } else {
    }
    %c0 = arith.constant 0 : index
    %c0_1 = arith.constant 0 : index
    %3 = vector.load %arg7[%c0, %c0_1] : memref<16x64xf32, #tpu.memory_space<vmem>>, vector<16x64xf32>
    %c0_2 = arith.constant 0 : index
    %c0_3 = arith.constant 0 : index
    %4 = vector.load %arg3[%c0_2, %c0_3] : memref<16x64xf32, #tpu.memory_space<vmem>>, vector<16x64xf32>
    %c0_4 = arith.constant 0 : index
    %c0_5 = arith.constant 0 : index
    %5 = vector.load %arg4[%c0_4, %c0_5] : memref<64x64xf32, #tpu.memory_space<vmem>>, vector<64x64xf32>
    %cst = arith.constant dense<0.000000e+00> : vector<16x64xf32>
    %6 = tpu.matmul %4, %5, %cst {dimension_numbers = #tpu.dot_dimension_numbers<[1], [0], [0], [1], [0, 0, 1, 1], [], []>} : vector<16x64xf32>, vector<64x64xf32>, vector<16x64xf32> -> vector<16x64xf32>
    %7 = arith.addf %3, %6 : vector<16x64xf32>
    %c0_6 = arith.constant 0 : index
    %c0_7 = arith.constant 0 : index
    %8 = vector.load %arg7[%c0_6, %c0_7] : memref<16x64xf32, #tpu.memory_space<vmem>>, vector<16x64xf32>
    tpu.vector_store %arg7[%c0_6, %c0_7], %7 {strides = array<i32>} : memref<16x64xf32, #tpu.memory_space<vmem>>, vector<16x64xf32>,
    %c0_i32_8 = arith.constant 0 : i32
    %9 = arith.cmpi eq, %arg2, %c0_i32_8 : i32
    %10 = arith.extui %9 : i1 to i32
    %c0_i32_9 = arith.constant 0 : i32
    %11 = arith.cmpi ne, %10, %c0_i32_9 : i32
    scf.if %11 {
      %c0_10 = arith.constant 0 : index
      %c0_11 = arith.constant 0 : index
      %12 = vector.load %arg7[%c0_10, %c0_11] : memref<16x64xf32, #tpu.memory_space<vmem>>, vector<16x64xf32>
      %cst_12 = arith.constant 2.200000e-01 : f32
      %13 = vector.broadcast %cst_12 : f32 to vector<16x64xf32>
      %14 = arith.mulf %12, %13 : vector<16x64xf32>
      %c0_13 = arith.constant 0 : index
      %c0_14 = arith.constant 0 : index
      %15 = vector.load %arg5[%c0_13, %c0_14] : memref<16x64xf32, #tpu.memory_space<vmem>>, vector<16x64xf32>
      %16 = arith.addf %14, %15 : vector<16x64xf32>
      %c0_15 = arith.constant 0 : index
      %c0_16 = arith.constant 0 : index
      %17 = vector.load %arg6[%c0_15, %c0_16] : memref<16x64xf32, #tpu.memory_space<vmem>>, vector<16x64xf32>
      tpu.vector_store %arg6[%c0_15, %c0_16], %16 {strides = array<i32>} : memref<16x64xf32, #tpu.memory_space<vmem>>, vector<16x64xf32>,
    } else {
    }
    return
  }
  func.func @transform_0(%arg0: i32, %arg1: i32, %arg2: i32) -> (i32, i32) {
    %c0_i32 = arith.constant 0 : i32
    return %arg0, %arg2 : i32, i32
  }
  func.func @transform_1(%arg0: i32, %arg1: i32, %arg2: i32) -> (i32, i32) {
    %c0_i32 = arith.constant 0 : i32
    return %arg2, %arg1 : i32, i32
  }
  func.func @transform_2(%arg0: i32, %arg1: i32, %arg2: i32) -> (i32, i32) {
    %c0_i32 = arith.constant 0 : i32
    return %arg0, %arg1 : i32, i32
  }
  func.func @transform_3(%arg0: i32, %arg1: i32, %arg2: i32) -> (i32, i32) {
    %c0_i32 = arith.constant 0 : i32
    return %arg0, %arg1 : i32, i32
  }
}

module attributes {stable_mosaic.version = 11 : i64} {
  func.func @_glu_kernel(%arg0: i32, %arg1: i32, %arg2: memref<16x64xf32, #tpu.memory_space<vmem>>, %arg3: memref<1x64xf32, #tpu.memory_space<vmem>>, %arg4: memref<2x64x192xf32, #tpu.memory_space<vmem>>, %arg5: memref<192x64xf32, #tpu.memory_space<vmem>>, %arg6: memref<16x64xf32, #tpu.memory_space<vmem>>, %arg7: memref<16x64xf32, #tpu.memory_space<vmem>>, %arg8: memref<16x64xf32, #tpu.memory_space<vmem>>) attributes {dimension_semantics = [#tpu.dimension_semantics<parallel>, #tpu.dimension_semantics<arbitrary>], iteration_bounds = array<i64: 1, 1>, scalar_prefetch = 0 : i64, scratch_operands = 2 : i64, tpu.core_type = #tpu.core_type<tc>, window_params = [{transform_indices = @transform_0, window_bounds = array<i64: 16, 64>}, {pipeline_mode = #tpu.pipeline_mode<synchronous>, transform_indices = @transform_1, window_bounds = array<i64: 1, 64>}, {transform_indices = @transform_2, window_bounds = array<i64: 2, 64, 192>}, {transform_indices = @transform_3, window_bounds = array<i64: 192, 64>}, {transform_indices = @transform_4, window_bounds = array<i64: 16, 64>}]} {
    %c0_i32 = arith.constant 0 : i32
    %0 = arith.cmpi eq, %arg1, %c0_i32 : i32
    %1 = arith.extui %0 : i1 to i32
    %c0_i32_0 = arith.constant 0 : i32
    %2 = arith.cmpi ne, %1, %c0_i32_0 : i32
    scf.if %2 {
      %c0_18 = arith.constant 0 : index
      %c0_19 = arith.constant 0 : index
      %25 = vector.load %arg2[%c0_18, %c0_19] : memref<16x64xf32, #tpu.memory_space<vmem>>, vector<16x64xf32>
      %26 = arith.mulf %25, %25 : vector<16x64xf32>
      %cst_20 = arith.constant dense<0.000000e+00> : vector<16xf32>
      %27 = vector.multi_reduction <add>, %26, %cst_20 [1] : vector<16x64xf32> to vector<16xf32>
      %28 = vector.shape_cast %27 : vector<16xf32> to vector<16x1xf32>
      %cst_21 = arith.constant 6.400000e+01 : f32
      %29 = vector.broadcast %cst_21 : f32 to vector<16x1xf32>
      %30 = arith.divf %28, %29 : vector<16x1xf32>
      %cst_22 = arith.constant 9.99999974E-6 : f32
      %31 = vector.broadcast %cst_22 : f32 to vector<16x1xf32>
      %32 = arith.addf %30, %31 : vector<16x1xf32>
      %33 = math.rsqrt %32 : vector<16x1xf32>
      %34 = vector.broadcast %33 : vector<16x1xf32> to vector<16x64xf32>
      %35 = arith.mulf %25, %34 : vector<16x64xf32>
      %c0_23 = arith.constant 0 : index
      %c0_24 = arith.constant 0 : index
      %36 = vector.load %arg3[%c0_23, %c0_24] : memref<1x64xf32, #tpu.memory_space<vmem>>, vector<1x64xf32>
      %37 = vector.broadcast %36 : vector<1x64xf32> to vector<16x64xf32>
      %38 = arith.mulf %35, %37 : vector<16x64xf32>
      %c0_25 = arith.constant 0 : index
      %c0_26 = arith.constant 0 : index
      %39 = vector.load %arg8[%c0_25, %c0_26] : memref<16x64xf32, #tpu.memory_space<vmem>>, vector<16x64xf32>
      tpu.vector_store %arg8[%c0_25, %c0_26], %38 {strides = array<i32>} : memref<16x64xf32, #tpu.memory_space<vmem>>, vector<16x64xf32>,
      %cst_27 = arith.constant 0.000000e+00 : f32
      %40 = vector.broadcast %cst_27 : f32 to vector<16x64xf32>
      %c0_28 = arith.constant 0 : index
      %c0_29 = arith.constant 0 : index
      %41 = vector.load %arg7[%c0_28, %c0_29] : memref<16x64xf32, #tpu.memory_space<vmem>>, vector<16x64xf32>
      tpu.vector_store %arg7[%c0_28, %c0_29], %40 {strides = array<i32>} : memref<16x64xf32, #tpu.memory_space<vmem>>, vector<16x64xf32>,
    } else {
    }
    %c0 = arith.constant 0 : index
    %c0_1 = arith.constant 0 : index
    %3 = vector.load %arg8[%c0, %c0_1] : memref<16x64xf32, #tpu.memory_space<vmem>>, vector<16x64xf32>
    %c0_2 = arith.constant 0 : index
    %c0_3 = arith.constant 0 : index
    %c0_4 = arith.constant 0 : index
    %4 = vector.load %arg4[%c0_2, %c0_3, %c0_4] : memref<2x64x192xf32, #tpu.memory_space<vmem>>, vector<1x64x192xf32>
    %5 = vector.shape_cast %4 : vector<1x64x192xf32> to vector<64x192xf32>
    %cst = arith.constant dense<0.000000e+00> : vector<16x192xf32>
    %6 = tpu.matmul %3, %5, %cst {dimension_numbers = #tpu.dot_dimension_numbers<[1], [0], [0], [1], [0, 0, 1, 1], [], []>} : vector<16x64xf32>, vector<64x192xf32>, vector<16x192xf32> -> vector<16x192xf32>
    %c1 = arith.constant 1 : index
    %c0_5 = arith.constant 0 : index
    %c0_6 = arith.constant 0 : index
    %7 = vector.load %arg4[%c1, %c0_5, %c0_6] : memref<2x64x192xf32, #tpu.memory_space<vmem>>, vector<1x64x192xf32>
    %8 = vector.shape_cast %7 : vector<1x64x192xf32> to vector<64x192xf32>
    %cst_7 = arith.constant dense<0.000000e+00> : vector<16x192xf32>
    %9 = tpu.matmul %3, %8, %cst_7 {dimension_numbers = #tpu.dot_dimension_numbers<[1], [0], [0], [1], [0, 0, 1, 1], [], []>} : vector<16x64xf32>, vector<64x192xf32>, vector<16x192xf32> -> vector<16x192xf32>
    %10 = arith.negf %6 : vector<16x192xf32>
    %11 = math.exp %10 : vector<16x192xf32>
    %cst_8 = arith.constant 1.000000e+00 : f32
    %12 = vector.broadcast %cst_8 : f32 to vector<16x192xf32>
    %13 = arith.addf %12, %11 : vector<16x192xf32>
    %14 = arith.divf %12, %13 : vector<16x192xf32>
    %15 = arith.mulf %6, %14 : vector<16x192xf32>
    %c0_9 = arith.constant 0 : index
    %c0_10 = arith.constant 0 : index
    %16 = vector.load %arg7[%c0_9, %c0_10] : memref<16x64xf32, #tpu.memory_space<vmem>>, vector<16x64xf32>
    %17 = arith.mulf %15, %9 : vector<16x192xf32>
    %c0_11 = arith.constant 0 : index
    %c0_12 = arith.constant 0 : index
    %18 = vector.load %arg5[%c0_11, %c0_12] : memref<192x64xf32, #tpu.memory_space<vmem>>, vector<192x64xf32>
    %cst_13 = arith.constant dense<0.000000e+00> : vector<16x64xf32>
    %19 = tpu.matmul %17, %18, %cst_13 {dimension_numbers = #tpu.dot_dimension_numbers<[1], [0], [0], [1], [0, 0, 1, 1], [], []>} : vector<16x192xf32>, vector<192x64xf32>, vector<16x64xf32> -> vector<16x64xf32>
    %20 = arith.addf %16, %19 : vector<16x64xf32>
    %c0_14 = arith.constant 0 : index
    %c0_15 = arith.constant 0 : index
    %21 = vector.load %arg7[%c0_14, %c0_15] : memref<16x64xf32, #tpu.memory_space<vmem>>, vector<16x64xf32>
    tpu.vector_store %arg7[%c0_14, %c0_15], %20 {strides = array<i32>} : memref<16x64xf32, #tpu.memory_space<vmem>>, vector<16x64xf32>,
    %c0_i32_16 = arith.constant 0 : i32
    %22 = arith.cmpi eq, %arg1, %c0_i32_16 : i32
    %23 = arith.extui %22 : i1 to i32
    %c0_i32_17 = arith.constant 0 : i32
    %24 = arith.cmpi ne, %23, %c0_i32_17 : i32
    scf.if %24 {
      %c0_18 = arith.constant 0 : index
      %c0_19 = arith.constant 0 : index
      %25 = vector.load %arg7[%c0_18, %c0_19] : memref<16x64xf32, #tpu.memory_space<vmem>>, vector<16x64xf32>
      %cst_20 = arith.constant 2.200000e-01 : f32
      %26 = vector.broadcast %cst_20 : f32 to vector<16x64xf32>
      %27 = arith.mulf %25, %26 : vector<16x64xf32>
      %c0_21 = arith.constant 0 : index
      %c0_22 = arith.constant 0 : index
      %28 = vector.load %arg2[%c0_21, %c0_22] : memref<16x64xf32, #tpu.memory_space<vmem>>, vector<16x64xf32>
      %29 = arith.addf %27, %28 : vector<16x64xf32>
      %c0_23 = arith.constant 0 : index
      %c0_24 = arith.constant 0 : index
      %30 = vector.load %arg6[%c0_23, %c0_24] : memref<16x64xf32, #tpu.memory_space<vmem>>, vector<16x64xf32>
      tpu.vector_store %arg6[%c0_23, %c0_24], %29 {strides = array<i32>} : memref<16x64xf32, #tpu.memory_space<vmem>>, vector<16x64xf32>,
    } else {
    }
    return
  }
  func.func @transform_0(%arg0: i32, %arg1: i32) -> (i32, i32) {
    %c0_i32 = arith.constant 0 : i32
    %c0_i32_0 = arith.constant 0 : i32
    return %arg0, %c0_i32 : i32, i32
  }
  func.func @transform_1(%arg0: i32, %arg1: i32) -> (i32, i32) {
    %c0_i32 = arith.constant 0 : i32
    %c0_i32_0 = arith.constant 0 : i32
    %c0_i32_1 = arith.constant 0 : i32
    return %c0_i32, %c0_i32_0 : i32, i32
  }
  func.func @transform_2(%arg0: i32, %arg1: i32) -> (i32, i32, i32) {
    %c0_i32 = arith.constant 0 : i32
    %c0_i32_0 = arith.constant 0 : i32
    %c0_i32_1 = arith.constant 0 : i32
    return %c0_i32, %c0_i32_0, %arg1 : i32, i32, i32
  }
  func.func @transform_3(%arg0: i32, %arg1: i32) -> (i32, i32) {
    %c0_i32 = arith.constant 0 : i32
    %c0_i32_0 = arith.constant 0 : i32
    return %arg1, %c0_i32 : i32, i32
  }
  func.func @transform_4(%arg0: i32, %arg1: i32) -> (i32, i32) {
    %c0_i32 = arith.constant 0 : i32
    %c0_i32_0 = arith.constant 0 : i32
    return %arg0, %c0_i32 : i32, i32
  }
}

module attributes {stable_mosaic.version = 11 : i64} {
  func.func @_norm_linear_kernel(%arg0: i32, %arg1: i32, %arg2: memref<16x64xf32, #tpu.memory_space<vmem>>, %arg3: memref<1x64xf32, #tpu.memory_space<vmem>>, %arg4: memref<64x256xf32, #tpu.memory_space<vmem>>, %arg5: memref<16x256xf32, #tpu.memory_space<vmem>>, %arg6: memref<16x64xf32, #tpu.memory_space<vmem>>) attributes {dimension_semantics = [#tpu.dimension_semantics<parallel>, #tpu.dimension_semantics<arbitrary>], iteration_bounds = array<i64: 1, 1>, scalar_prefetch = 0 : i64, scratch_operands = 1 : i64, tpu.core_type = #tpu.core_type<tc>, window_params = [{transform_indices = @transform_0, window_bounds = array<i64: 16, 64>}, {pipeline_mode = #tpu.pipeline_mode<synchronous>, transform_indices = @transform_1, window_bounds = array<i64: 1, 64>}, {transform_indices = @transform_2, window_bounds = array<i64: 64, 256>}, {transform_indices = @transform_3, window_bounds = array<i64: 16, 256>}]} {
    %c0_i32 = arith.constant 0 : i32
    %0 = arith.cmpi eq, %arg1, %c0_i32 : i32
    %1 = arith.extui %0 : i1 to i32
    %c0_i32_0 = arith.constant 0 : i32
    %2 = arith.cmpi ne, %1, %c0_i32_0 : i32
    scf.if %2 {
      %c0_7 = arith.constant 0 : index
      %c0_8 = arith.constant 0 : index
      %9 = vector.load %arg2[%c0_7, %c0_8] : memref<16x64xf32, #tpu.memory_space<vmem>>, vector<16x64xf32>
      %10 = arith.mulf %9, %9 : vector<16x64xf32>
      %cst_9 = arith.constant dense<0.000000e+00> : vector<16xf32>
      %11 = vector.multi_reduction <add>, %10, %cst_9 [1] : vector<16x64xf32> to vector<16xf32>
      %12 = vector.shape_cast %11 : vector<16xf32> to vector<16x1xf32>
      %cst_10 = arith.constant 6.400000e+01 : f32
      %13 = vector.broadcast %cst_10 : f32 to vector<16x1xf32>
      %14 = arith.divf %12, %13 : vector<16x1xf32>
      %cst_11 = arith.constant 9.99999974E-6 : f32
      %15 = vector.broadcast %cst_11 : f32 to vector<16x1xf32>
      %16 = arith.addf %14, %15 : vector<16x1xf32>
      %17 = math.rsqrt %16 : vector<16x1xf32>
      %18 = vector.broadcast %17 : vector<16x1xf32> to vector<16x64xf32>
      %19 = arith.mulf %9, %18 : vector<16x64xf32>
      %c0_12 = arith.constant 0 : index
      %c0_13 = arith.constant 0 : index
      %20 = vector.load %arg3[%c0_12, %c0_13] : memref<1x64xf32, #tpu.memory_space<vmem>>, vector<1x64xf32>
      %21 = vector.broadcast %20 : vector<1x64xf32> to vector<16x64xf32>
      %22 = arith.mulf %19, %21 : vector<16x64xf32>
      %c0_14 = arith.constant 0 : index
      %c0_15 = arith.constant 0 : index
      %23 = vector.load %arg6[%c0_14, %c0_15] : memref<16x64xf32, #tpu.memory_space<vmem>>, vector<16x64xf32>
      tpu.vector_store %arg6[%c0_14, %c0_15], %22 {strides = array<i32>} : memref<16x64xf32, #tpu.memory_space<vmem>>, vector<16x64xf32>,
    } else {
    }
    %c0 = arith.constant 0 : index
    %c0_1 = arith.constant 0 : index
    %3 = vector.load %arg6[%c0, %c0_1] : memref<16x64xf32, #tpu.memory_space<vmem>>, vector<16x64xf32>
    %c0_2 = arith.constant 0 : index
    %c0_3 = arith.constant 0 : index
    %4 = vector.load %arg4[%c0_2, %c0_3] : memref<64x256xf32, #tpu.memory_space<vmem>>, vector<64x256xf32>
    %cst = arith.constant dense<0.000000e+00> : vector<16x256xf32>
    %5 = tpu.matmul %3, %4, %cst {dimension_numbers = #tpu.dot_dimension_numbers<[1], [0], [0], [1], [0, 0, 1, 1], [], []>} : vector<16x64xf32>, vector<64x256xf32>, vector<16x256xf32> -> vector<16x256xf32>
    %cst_4 = arith.constant 1.250000e-01 : f32
    %6 = vector.broadcast %cst_4 : f32 to vector<16x256xf32>
    %7 = arith.mulf %5, %6 : vector<16x256xf32>
    %c0_5 = arith.constant 0 : index
    %c0_6 = arith.constant 0 : index
    %8 = vector.load %arg5[%c0_5, %c0_6] : memref<16x256xf32, #tpu.memory_space<vmem>>, vector<16x256xf32>
    tpu.vector_store %arg5[%c0_5, %c0_6], %7 {strides = array<i32>} : memref<16x256xf32, #tpu.memory_space<vmem>>, vector<16x256xf32>,
    return
  }
  func.func @transform_0(%arg0: i32, %arg1: i32) -> (i32, i32) {
    %c0_i32 = arith.constant 0 : i32
    %c0_i32_0 = arith.constant 0 : i32
    return %arg0, %c0_i32 : i32, i32
  }
  func.func @transform_1(%arg0: i32, %arg1: i32) -> (i32, i32) {
    %c0_i32 = arith.constant 0 : i32
    %c0_i32_0 = arith.constant 0 : i32
    %c0_i32_1 = arith.constant 0 : i32
    return %c0_i32, %c0_i32_0 : i32, i32
  }
  func.func @transform_2(%arg0: i32, %arg1: i32) -> (i32, i32) {
    %c0_i32 = arith.constant 0 : i32
    %c0_i32_0 = arith.constant 0 : i32
    return %c0_i32, %arg1 : i32, i32
  }
  func.func @transform_3(%arg0: i32, %arg1: i32) -> (i32, i32) {
    %c0_i32 = arith.constant 0 : i32
    return %arg0, %arg1 : i32, i32
  }
}

</mosaic_0001>

<llo_original>
// kernel: _lambda_.9
$region0: #{_lambda_.9}
  #allocation0 [shape = 'u32[]', space=smem, size = 0x4, offset = 0x4, fixed_abs, tag = 'smem constant byte address 0x4 - core index']
  #allocation1 [shape = 'u32[72,128]{1,0:T(1,128)}', space=vmem, size = 0x9000, scoped, tag = 'internal scratch']
  #allocation2 [shape = 'f32[16,64]{1,0:T(8,128)}', space=vmem, size = 0x2000, scoped, tag = 'scratch operand']
  %s0 = inlined_call_operand.vmem [shape: f32[16,64], index: 0, kind: input, shape index: {}]
  %s1 = inlined_call_operand.vmem [shape: f32[1,64], index: 1, kind: input, shape index: {}]
  %s2 = inlined_call_operand.vmem [shape: f32[64,192], index: 2, kind: input, shape index: {}]
  %s3 = inlined_call_operand.vmem [shape: f32[16,192], index: 3, kind: output, shape index: {}]
  %s4 = sld [smem:[#allocation0]]
  $region26: #{_lambda_.9} parent=0
    _
  %s6 = ssub.s32 1, %s4
  %s7 = scalar_select 0, %s6, %s4
  // Predicated region
  $region2: #{_lambda_.9} parent=0 // pred_check
    _
  $region3: #{_lambda_.9} parent=0 // pred_check_branch
    %9 = sbr.rel (0) target = $region5
  $region4: #{_lambda_.9} parent=0 // pred_region
    _
  $region5: #{_lambda_.9} parent=0 // pred_fallthru
    _
  // Predicated region
  $region6: #{_lambda_.9} parent=0 // pred_check
    _
  $region7: #{_lambda_.9} parent=0 // pred_check_branch
    %11 = sbr.rel (0) target = $region9
  $region8: #{_lambda_.9} parent=0 // pred_region
    _
  $region9: #{_lambda_.9} parent=0 // pred_fallthru
    _
  // Predicated region
  $region10: #{_lambda_.9} parent=0 // pred_check
    _
  $region11: #{_lambda_.9} parent=0 // pred_check_branch
    %13 = sbr.rel (0) target = $region13
  $region12: #{_lambda_.9} parent=0 // pred_region
    _
  $region13: #{_lambda_.9} parent=0 // pred_fallthru
    _
  %p14 = scmp.eq.s32.totalorder 0, 0
  // Predicated region
  $region14: #{_lambda_.9} parent=0 // pred_check
    %p15 = pneg %p14
  $region15: #{_lambda_.9} parent=0 // pred_check_branch
    %17 = sbr.rel (%p15) target = $region17
  $region16: #{_lambda_.9} parent=0 // pred_region
    %v18 = vld [vmem:[%s0] sm:$0xff]
    %v19 = vld [vmem:[%s0 + $0x8] sm:$0xff]
    %v20 = vmul.f32 %v18, %v18
    %v21 = vmul.f32 %v19, %v19
    %vm22 = vcmask 523264
    %v23 = vsel %vm22, %v20, 0.0
    %24 = vadd.xlane.f32.xlu0 %v23
    %v25 = vpop.xlane.xlu0 %24
    %v26 = vsel %vm22, %v21, 0.0
    %27 = vadd.xlane.f32.xlu0 %v26
    %v28 = vpop.xlane.xlu0 %27
    %v29 = vrcp.pop 64.0
    %v30 = vmul.f32 64.0, %v29
    %v31 = vsub.f32 1.0, %v30
    %v32 = vmul.f32 %v29, %v31
    %v33 = vadd.f32 %v29, %v32
    %vm34 = vweird.f32 %v29
    %v35 = vsel %vm34, %v29, %v33
    %v36 = vmul.f32 %v25, %v35
    %v37 = vmul.f32 %v28, %v35
    %v38 = vadd.f32 %v36, 1e-05
    %v39 = vadd.f32 %v37, 1e-05
    %v40 = vrsqrt.pop %v38
    %v41 = vmul.f32 %v40, %v38
    %v42 = vmul.f32 %v41, %v40
    %v43 = vmul.f32 0.5, %v42
    %v44 = vsub.f32 1.5, %v43
    %v45 = vmul.f32 %v40, %v44
    %vm46 = vweird.f32 %v38
    %vm47 = vweird.f32 %v40
    %vm48 = vmor %vm46, %vm47
    %v49 = vsel %vm48, %v40, %v45
    %v50 = vrsqrt.pop %v39
    %v51 = vmul.f32 %v50, %v39
    %v52 = vmul.f32 %v51, %v50
    %v53 = vmul.f32 0.5, %v52
    %v54 = vsub.f32 1.5, %v53
    %v55 = vmul.f32 %v50, %v54
    %vm56 = vweird.f32 %v39
    %vm57 = vweird.f32 %v50
    %vm58 = vmor %vm56, %vm57
    %v59 = vsel %vm58, %v50, %v55
    %v60 = vmul.f32 %v18, %v49
    %v61 = vmul.f32 %v19, %v59
    %v62 = vld [vmem:[%s1] sm:$0x1]
    %v64 = vperm.slane %v62, 0
    %v66 = vmul.f32 %v60, %v64
    %v67 = vmul.f32 %v61, %v64
    %68 = vst.msk [vmem:[#allocation2] sm:$0xff] %vm22, %v66
    %69 = vst.msk [vmem:[#allocation2 + $0x8] sm:$0xff] %vm22, %v67
  $region17: #{_lambda_.9} parent=0 // pred_fallthru
    _
  %v70 = vld [vmem:[#allocation2] sm:$0xff]
  %v71 = vld [vmem:[#allocation2 + $0x8] sm:$0xff]
  %v72 = vld [vmem:[%s2] sm:$0xff]
  %v73 = vld [vmem:[%s2 + $0x8] sm:$0xff]
  %v74 = vld [vmem:[%s2 + $0x10] sm:$0xff]
  %v75 = vld [vmem:[%s2 + $0x18] sm:$0xff]
  %v76 = vld [vmem:[%s2 + $0x20] sm:$0xff]
  %v77 = vld [vmem:[%s2 + $0x28] sm:$0xff]
  %v78 = vld [vmem:[%s2 + $0x30] sm:$0xff]
  %v79 = vld [vmem:[%s2 + $0x38] sm:$0xff]
  %v80 = vld [vmem:[%s2 + $0x40] sm:$0xff]
  %v81 = vld [vmem:[%s2 + $0x48] sm:$0xff]
  %v82 = vld [vmem:[%s2 + $0x50] sm:$0xff]
  %v83 = vld [vmem:[%s2 + $0x58] sm:$0xff]
  %v84 = vld [vmem:[%s2 + $0x60] sm:$0xff]
  %v85 = vld [vmem:[%s2 + $0x68] sm:$0xff]
  %v86 = vld [vmem:[%s2 + $0x70] sm:$0xff]
  %v87 = vld [vmem:[%s2 + $0x78] sm:$0xff]
  %vm88 = vcmask 523264
  %v90 = vsel %vm88, %v70, 0
  %v93 = vsel %vm88, %v71, 0
  %95 = vmatpush.msra.mxu0 0.0
  %96 = vmatpush.msra.mxu0 0.0
  %97 = vmatpush.msra.mxu0 0.0
  %98 = vmatpush.msra.mxu0 0.0
  %99 = vmatpush.msra.mxu0 0.0
  %100 = vmatpush.msra.mxu0 0.0
  %101 = vmatpush.msra.mxu0 0.0
  %102 = vmatpush.msra.mxu0 0.0
  %103 = vmatpush.msra.mxu0 %v86
  %104 = vmatpush.msra.mxu0 %v84
  %105 = vmatpush.msra.mxu0 %v82
  %106 = vmatpush.msra.mxu0 %v80
  %107 = vmatpush.msra.mxu0 %v78
  %108 = vmatpush.msra.mxu0 %v76
  %109 = vmatpush.msra.mxu0 %v74
  %110 = vmatpush.msra.mxu0 %v72
  %111 = vmatmul.f32.gmra.mxu0 %v90
  %v112 = vpop.f32.mrf.mxu0
  %v113 = vadd.f32 0.0, %v112
  %114 = vmatmul.f32.gmra.mxu0 %v93
  %v115 = vpop.f32.mrf.mxu0
  %v116 = vadd.f32 0.0, %v115
  %117 = vdwg.mxu0
  %118 = vmatpush.msra.mxu0 0.0
  %119 = vmatpush.msra.mxu0 0.0
  %120 = vmatpush.msra.mxu0 0.0
  %121 = vmatpush.msra.mxu0 0.0
  %122 = vmatpush.msra.mxu0 0.0
  %123 = vmatpush.msra.mxu0 0.0
  %124 = vmatpush.msra.mxu0 0.0
  %125 = vmatpush.msra.mxu0 0.0
  %126 = vmatpush.msra.mxu0 %v87
  %127 = vmatpush.msra.mxu0 %v85
  %128 = vmatpush.msra.mxu0 %v83
  %129 = vmatpush.msra.mxu0 %v81
  %130 = vmatpush.msra.mxu0 %v79
  %131 = vmatpush.msra.mxu0 %v77
  %132 = vmatpush.msra.mxu0 %v75
  %133 = vmatpush.msra.mxu0 %v73
  %134 = vmatmul.f32.gmra.mxu0 %v90
  %v135 = vpop.f32.mrf.mxu0
  %v136 = vadd.f32 0.0, %v135
  %137 = vmatmul.f32.gmra.mxu0 %v93
  %v138 = vpop.f32.mrf.mxu0
  %v139 = vadd.f32 0.0, %v138
  %140 = vdwg.mxu0
  %141 = vst [vmem:[%s3] sm:$0xff] %v113
  %142 = vst.msk [vmem:[%s3 + $0x8] sm:$0xff] %vm88, %v136
  %143 = vst [vmem:[%s3 + $0x10] sm:$0xff] %v116
  %144 = vst.msk [vmem:[%s3 + $0x18] sm:$0xff] %vm88, %v139
  // Predicated region
  $region18: #{_lambda_.9} parent=0 // pred_check
    _
  $region19: #{_lambda_.9} parent=0 // pred_check_branch
    %146 = sbr.rel (0) target = $region21
  $region20: #{_lambda_.9} parent=0 // pred_region
    _
  $region21: #{_lambda_.9} parent=0 // pred_fallthru
    _
  // Predicated region
  $region22: #{_lambda_.9} parent=0 // pred_check
    _
  $region23: #{_lambda_.9} parent=0 // pred_check_branch
    %148 = sbr.rel (0) target = $region25
  $region24: #{_lambda_.9} parent=0 // pred_region
    _
  $region25: #{_lambda_.9} parent=0 // pred_fallthru
    _

// kernel: _lambda_.11
$region0: #{_lambda_.11}
  #allocation0 [shape = 'u32[]', space=smem, size = 0x4, offset = 0x4, fixed_abs, tag = 'smem constant byte address 0x4 - core index']
  #allocation1 [shape = 'u32[72,128]{1,0:T(1,128)}', space=vmem, size = 0x9000, scoped, tag = 'internal scratch']
  #allocation2 [shape = 'f32[16,64]{1,0:T(8,128)}', space=vmem, size = 0x2000, scoped, tag = 'scratch operand']
  %s0 = inlined_call_operand.vmem [shape: f32[16,64], index: 0, kind: input, shape index: {}]
  %s1 = inlined_call_operand.vmem [shape: f32[64,64], index: 1, kind: input, shape index: {}]
  %s2 = inlined_call_operand.vmem [shape: f32[16,64], index: 2, kind: input, shape index: {}]
  %s3 = inlined_call_operand.vmem [shape: f32[16,64], index: 3, kind: output, shape index: {}]
  %s4 = sld [smem:[#allocation0]]
  $region30: #{_lambda_.11} parent=0
    _
  %s6 = ssub.s32 1, %s4
  %s7 = scalar_select 0, %s6, %s4
  // Predicated region
  $region2: #{_lambda_.11} parent=0 // pred_check
    _
  $region3: #{_lambda_.11} parent=0 // pred_check_branch
    %9 = sbr.rel (0) target = $region5
  $region4: #{_lambda_.11} parent=0 // pred_region
    _
  $region5: #{_lambda_.11} parent=0 // pred_fallthru
    _
  // Predicated region
  $region6: #{_lambda_.11} parent=0 // pred_check
    _
  $region7: #{_lambda_.11} parent=0 // pred_check_branch
    %11 = sbr.rel (0) target = $region9
  $region8: #{_lambda_.11} parent=0 // pred_region
    _
  $region9: #{_lambda_.11} parent=0 // pred_fallthru
    _
  // Predicated region
  $region10: #{_lambda_.11} parent=0 // pred_check
    _
  $region11: #{_lambda_.11} parent=0 // pred_check_branch
    %13 = sbr.rel (0) target = $region13
  $region12: #{_lambda_.11} parent=0 // pred_region
    _
  $region13: #{_lambda_.11} parent=0 // pred_fallthru
    _
  %p14 = scmp.eq.s32.totalorder 0, 0
  // Predicated region
  $region14: #{_lambda_.11} parent=0 // pred_check
    %p15 = pneg %p14
  $region15: #{_lambda_.11} parent=0 // pred_check_branch
    %17 = sbr.rel (%p15) target = $region17
  $region16: #{_lambda_.11} parent=0 // pred_region
    %vm18 = vcmask 523264
    %19 = vst.msk [vmem:[#allocation2] sm:$0xff] %vm18, 0.0
    %20 = vst.msk [vmem:[#allocation2 + $0x8] sm:$0xff] %vm18, 0.0
  $region17: #{_lambda_.11} parent=0 // pred_fallthru
    _
  %v21 = vld [vmem:[#allocation2] sm:$0xff]
  %v22 = vld [vmem:[#allocation2 + $0x8] sm:$0xff]
  %v23 = vld [vmem:[%s0] sm:$0xff]
  %v24 = vld [vmem:[%s0 + $0x8] sm:$0xff]
  %v25 = vld [vmem:[%s1] sm:$0xff]
  %v26 = vld [vmem:[%s1 + $0x8] sm:$0xff]
  %v27 = vld [vmem:[%s1 + $0x10] sm:$0xff]
  %v28 = vld [vmem:[%s1 + $0x18] sm:$0xff]
  %v29 = vld [vmem:[%s1 + $0x20] sm:$0xff]
  %v30 = vld [vmem:[%s1 + $0x28] sm:$0xff]
  %v31 = vld [vmem:[%s1 + $0x30] sm:$0xff]
  %v32 = vld [vmem:[%s1 + $0x38] sm:$0xff]
  %vm33 = vcmask 523264
  %v35 = vsel %vm33, %v23, 0
  %v38 = vsel %vm33, %v24, 0
  %40 = vmatpush.msra.mxu0 0.0
  %41 = vmatpush.msra.mxu0 0.0
  %42 = vmatpush.msra.mxu0 0.0
  %43 = vmatpush.msra.mxu0 0.0
  %44 = vmatpush.msra.mxu0 0.0
  %45 = vmatpush.msra.mxu0 0.0
  %46 = vmatpush.msra.mxu0 0.0
  %47 = vmatpush.msra.mxu0 0.0
  %48 = vmatpush.msra.mxu0 %v32
  %49 = vmatpush.msra.mxu0 %v31
  %50 = vmatpush.msra.mxu0 %v30
  %51 = vmatpush.msra.mxu0 %v29
  %52 = vmatpush.msra.mxu0 %v28
  %53 = vmatpush.msra.mxu0 %v27
  %54 = vmatpush.msra.mxu0 %v26
  %55 = vmatpush.msra.mxu0 %v25
  %56 = vmatmul.f32.gmra.mxu0 %v35
  %v57 = vpop.f32.mrf.mxu0
  %v58 = vadd.f32 0.0, %v57
  %59 = vmatmul.f32.gmra.mxu0 %v38
  %v60 = vpop.f32.mrf.mxu0
  %v61 = vadd.f32 0.0, %v60
  %62 = vdwg.mxu0
  %v63 = vadd.f32 %v21, %v58
  %v64 = vadd.f32 %v22, %v61
  %65 = vst.msk [vmem:[#allocation2] sm:$0xff] %vm33, %v63
  %66 = vst.msk [vmem:[#allocation2 + $0x8] sm:$0xff] %vm33, %v64
  // Predicated region
  $region18: #{_lambda_.11} parent=0 // pred_check
    %p67 = pneg %p14
  $region19: #{_lambda_.11} parent=0 // pred_check_branch
    %69 = sbr.rel (%p67) target = $region21
  $region20: #{_lambda_.11} parent=0 // pred_region
    %v70 = vld [vmem:[#allocation2] sm:$0xff]
    %v71 = vld [vmem:[#allocation2 + $0x8] sm:$0xff]
    %v72 = vmul.f32 %v70, 0.22
    %v73 = vmul.f32 %v71, 0.22
    %v74 = vld [vmem:[%s2] sm:$0xff]
    %v75 = vld [vmem:[%s2 + $0x8] sm:$0xff]
    %v76 = vadd.f32 %v72, %v74
    %v77 = vadd.f32 %v73, %v75
    %78 = vst.msk [vmem:[%s3] sm:$0xff] %vm33, %v76
    %79 = vst.msk [vmem:[%s3 + $0x8] sm:$0xff] %vm33, %v77
  $region21: #{_lambda_.11} parent=0 // pred_fallthru
    _
  // Predicated region
  $region22: #{_lambda_.11} parent=0 // pred_check
    _
  $region23: #{_lambda_.11} parent=0 // pred_check_branch
    %81 = sbr.rel (0) target = $region25
  $region24: #{_lambda_.11} parent=0 // pred_region
    _
  $region25: #{_lambda_.11} parent=0 // pred_fallthru
    _
  // Predicated region
  $region26: #{_lambda_.11} parent=0 // pred_check
    _
  $region27: #{_lambda_.11} parent=0 // pred_check_branch
    %83 = sbr.rel (0) target = $region29
  $region28: #{_lambda_.11} parent=0 // pred_region
    _
  $region29: #{_lambda_.11} parent=0 // pred_fallthru
    _

// kernel: _lambda_.10
$region0: #{_lambda_.10}
  #allocation0 [shape = 'u32[]', space=smem, size = 0x4, offset = 0x4, fixed_abs, tag = 'smem constant byte address 0x4 - core index']
  #allocation1 [shape = 'u32[72,128]{1,0:T(1,128)}', space=vmem, size = 0x9000, scoped, tag = 'internal scratch']
  #allocation2 [shape = 'f32[4,8,16]{2,1,0:T(8,128)}', space=vmem, size = 0x4000, scoped, tag = 'scratch operand']
  #allocation3 [shape = 'f32[4,8,1]{2,1,0:T(8,128)}', space=vmem, size = 0x4000, scoped, tag = 'scratch operand']
  #allocation4 [shape = 'f32[4,8,1]{2,1,0:T(8,128)}', space=vmem, size = 0x4000, scoped, tag = 'scratch operand']
  #allocation5 [shape = 'f32[4,8,16]{2,1,0:T(8,128)}', space=vmem, size = 0x4000, scoped, tag = 'scratch operand']
  %s0 = inlined_call_operand.vmem [shape: f32[2,4,8,16], index: 0, kind: input, shape index: {}]
  %s1 = inlined_call_operand.vmem [shape: f32[2,4,8,16], index: 1, kind: input, shape index: {}]
  %s2 = inlined_call_operand.vmem [shape: f32[2,4,8,16], index: 2, kind: input, shape index: {}]
  %s3 = inlined_call_operand.vmem [shape: f32[2,4,8,16], index: 3, kind: output, shape index: {}]
  %s4 = sld [smem:[#allocation0]]
  $region61: #{_lambda_.10} parent=0
    _
  %s6 = ssub.s32 1, %s4
  %s7 = scalar_select 0, %s6, %s4
  loop: start=0, step=1, limit=4
  $region2: #{_lambda_.10} parent=0 // loop_pre_header
    _
  $region3: #{_lambda_.10} parent=0 // loop_header
    %s9 = sphi 0, %s13
    %p10 = scmp.ge.s32.totalorder %s9, 4
    %s16 = sphi 0, %s42
    %s17 = sphi 0, %s38
    %s18 = sphi 0, %s34
    %s19 = sphi 0, %s30
    %s20 = sphi 0, %s16
    %s21 = sphi 0, %s17
    %s22 = sphi 0, %s18
    %s23 = sphi 0, %s19
    %s24 = sphi 0, %s20
    %s25 = sphi 0, %s21
    %s26 = sphi 0, %s22
    %s27 = sphi 0, %s23
    %s49 = sphi 0, %s51
    %s52 = sphi 0, %s49
    %s53 = sphi 0, %s52
    %s69 = sphi 0, %s53
    %s83 = sphi 0, %s85
    %s86 = sphi 0, %s83
    %s87 = sphi 0, %s86
    %s103 = sphi 0, %s87
    %s117 = sphi 0, %s119
    %s120 = sphi 0, %s117
    %s121 = sphi 0, %s120
    %s137 = sphi 0, %s121
    %s147 = sphi 0, %s149
    %s150 = sphi 0, %s147
    %s151 = sphi 0, %s150
    %s167 = sphi 0, %s151
  $region4: #{_lambda_.10} parent=0 // loop_header_branch
    %12 = sbr.rel (%p10) target = $region8
  $region5: #{_lambda_.10} parent=0 // loop_body
    %s14 = ssub.s32 %s9, 1
    %s15 = ssub.s32 %s9, 2
    %s28 = sadd.s32 1, %s19
    %p29 = scmp.ge.s32.totalorder %s28, 1
    %s30 = scalar_select %p29, 0, %s28
    %s31 = sadd.s32 1, %s18
    %s32 = scalar_select %p29, %s31, %s18
    %p33 = scmp.ge.s32.totalorder %s32, 1
    %s34 = scalar_select %p33, 0, %s32
    %s35 = sadd.s32 1, %s17
    %s36 = scalar_select %p33, %s35, %s17
    %p37 = scmp.ge.s32.totalorder %s36, 1
    %s38 = scalar_select %p37, 0, %s36
    %s39 = sadd.s32 1, %s16
    %s40 = scalar_select %p37, %s39, %s16
    %p41 = scmp.ge.s32.totalorder %s40, 2
    %s42 = scalar_select %p41, 0, %s40
    %s43 = ssub.s32 %s16, %s42
    %s44 = ssub.s32 %s17, %s38
    %s45 = sor.u32 %s43, %s44
    %s46 = ssub.s32 %s18, %s34
    %s47 = sor.u32 %s45, %s46
    %p48 = scmp.eq.s32.totalorder %s47, 0
    %s50 = sadd.s32 %s49, 1
    %s51 = scalar_select %p48, %s49, %s50
    %p54 = pneg %p48
    %p55 = scmp.eq.s32.totalorder %s9, 1
    %p56 = por %p54, %p55
    %p57 = scmp.ne.s32.totalorder %s49, %s52
    %p58 = scmp.eq.s32.totalorder %s9, 0
    %p59 = por %p57, %p58
    %p60 = scmp.ne.s32.totalorder %s49, %s52
    %p61 = scmp.eq.s32.totalorder %s14, 1
    %p62 = por %p60, %p61
    %p63 = scmp.ne.s32.totalorder %s52, %s53
    %p64 = scmp.eq.s32.totalorder %s14, 0
    %p65 = por %p63, %p64
    %p66 = scmp.ne.s32.totalorder %s52, %s53
    %p67 = scmp.eq.s32.totalorder %s15, 1
    %p68 = por %p66, %p67
    %p70 = scmp.ne.s32.totalorder %s53, %s69
    %p71 = scmp.eq.s32.totalorder %s15, 0
    %p72 = por %p70, %p71
    %p73 = scmp.lt.s32.totalorder %s19, %s18
    %s74 = scalar_select %p73, %s19, %s18
    %p75 = scmp.lt.s32.totalorder %s30, %s34
    %s76 = scalar_select %p75, %s30, %s34
    %s77 = ssub.s32 %s16, %s42
    %s78 = ssub.s32 %s17, %s38
    %s79 = sor.u32 %s77, %s78
    %s80 = ssub.s32 %s74, %s76
    %s81 = sor.u32 %s79, %s80
    %p82 = scmp.eq.s32.totalorder %s81, 0
    %s84 = sadd.s32 %s83, 1
    %s85 = scalar_select %p82, %s83, %s84
    %p88 = pneg %p82
    %p89 = scmp.eq.s32.totalorder %s9, 1
    %p90 = por %p88, %p89
    %p91 = scmp.ne.s32.totalorder %s83, %s86
    %p92 = scmp.eq.s32.totalorder %s9, 0
    %p93 = por %p91, %p92
    %p94 = scmp.ne.s32.totalorder %s83, %s86
    %p95 = scmp.eq.s32.totalorder %s14, 1
    %p96 = por %p94, %p95
    %p97 = scmp.ne.s32.totalorder %s86, %s87
    %p98 = scmp.eq.s32.totalorder %s14, 0
    %p99 = por %p97, %p98
    %p100 = scmp.ne.s32.totalorder %s86, %s87
    %p101 = scmp.eq.s32.totalorder %s15, 1
    %p102 = por %p100, %p101
    %p104 = scmp.ne.s32.totalorder %s87, %s103
    %p105 = scmp.eq.s32.totalorder %s15, 0
    %p106 = por %p104, %p105
    %p107 = scmp.lt.s32.totalorder %s19, %s18
    %s108 = scalar_select %p107, %s19, %s18
    %p109 = scmp.lt.s32.totalorder %s30, %s34
    %s110 = scalar_select %p109, %s30, %s34
    %s111 = ssub.s32 %s16, %s42
    %s112 = ssub.s32 %s17, %s38
    %s113 = sor.u32 %s111, %s112
    %s114 = ssub.s32 %s108, %s110
    %s115 = sor.u32 %s113, %s114
    %p116 = scmp.eq.s32.totalorder %s115, 0
    %s118 = sadd.s32 %s117, 1
    %s119 = scalar_select %p116, %s117, %s118
    %p122 = pneg %p116
    %p123 = scmp.eq.s32.totalorder %s9, 1
    %p124 = por %p122, %p123
    %p125 = scmp.ne.s32.totalorder %s117, %s120
    %p126 = scmp.eq.s32.totalorder %s9, 0
    %p127 = por %p125, %p126
    %p128 = scmp.ne.s32.totalorder %s117, %s120
    %p129 = scmp.eq.s32.totalorder %s14, 1
    %p130 = por %p128, %p129
    %p131 = scmp.ne.s32.totalorder %s120, %s121
    %p132 = scmp.eq.s32.totalorder %s14, 0
    %p133 = por %p131, %p132
    %p134 = scmp.ne.s32.totalorder %s120, %s121
    %p135 = scmp.eq.s32.totalorder %s15, 1
    %p136 = por %p134, %p135
    %p138 = scmp.ne.s32.totalorder %s121, %s137
    %p139 = scmp.eq.s32.totalorder %s15, 0
    %p140 = por %p138, %p139
    %s141 = ssub.s32 %s16, %s42
    %s142 = ssub.s32 %s17, %s38
    %s143 = sor.u32 %s141, %s142
    %s144 = ssub.s32 %s18, %s34
    %s145 = sor.u32 %s143, %s144
    %p146 = scmp.eq.s32.totalorder %s145, 0
    %s148 = sadd.s32 %s147, 1
    %s149 = scalar_select %p146, %s147, %s148
    %p152 = pneg %p146
    %p153 = scmp.eq.s32.totalorder %s9, 1
    %p154 = por %p152, %p153
    %p155 = scmp.ne.s32.totalorder %s147, %s150
    %p156 = scmp.eq.s32.totalorder %s9, 0
    %p157 = por %p155, %p156
    %p158 = scmp.ne.s32.totalorder %s147, %s150
    %p159 = scmp.eq.s32.totalorder %s14, 1
    %p160 = por %p158, %p159
    %p161 = scmp.ne.s32.totalorder %s150, %s151
    %p162 = scmp.eq.s32.totalorder %s14, 0
    %p163 = por %p161, %p162
    %p164 = scmp.ne.s32.totalorder %s150, %s151
    %p165 = scmp.eq.s32.totalorder %s15, 1
    %p166 = por %p164, %p165
    %p168 = scmp.ne.s32.totalorder %s151, %s167
    %p169 = scmp.eq.s32.totalorder %s15, 0
    %p170 = por %p168, %p169
    %p171 = scmp.le.s32.totalorder 1, %s9
    %p172 = scmp.lt.s32.totalorder %s9, 3
    %p173 = pnand %p171, %p172
    %p174 = pneg %p173
    // Predicated region
    $region9: #{_lambda_.10} parent=5 // pred_check
      _
    $region10: #{_lambda_.10} parent=5 // pred_check_branch
      %176 = sbr.rel (%p173) target = $region12
    $region11: #{_lambda_.10} parent=5 // pred_region
      %s177 = ssub.s32 %s9, 1
    $region12: #{_lambda_.10} parent=5 // pred_fallthru
      _
    %p178 = scmp.lt.s32.totalorder %s9, 2
    // Predicated region
    $region13: #{_lambda_.10} parent=5 // pred_check
      %p179 = pneg %p178
    $region14: #{_lambda_.10} parent=5 // pred_check_branch
      %181 = sbr.rel (%p179) target = $region16
    $region15: #{_lambda_.10} parent=5 // pred_region
      // Predicated region
      $region17: #{_lambda_.10} parent=15 // pred_check
        %p182 = pneg %p59
      $region18: #{_lambda_.10} parent=15 // pred_check_branch
        %184 = sbr.rel (%p182) target = $region20
      $region19: #{_lambda_.10} parent=15 // pred_region
        %s185 = smul.u32 4, %s17
        %p186 = scmp.lt.s32.totalorder %s16, 1
        %s187 = scalar_select %p186, %s16, 1
        %p188 = scmp.lt.s32.totalorder %s185, 3
        %s189 = scalar_select %p188, %s185, 3
        %p190 = scmp.lt.s32.totalorder %s18, 0
        %s191 = scalar_select %p190, %s18, 0
        %s192 = sadd.s32 %s191, %s189
        %s193 = smul.addr %s187, 4
        %s194 = sadd.s32 %s192, %s193
        %s195 = smul.addr %s194, 8
        %s196 = scalar_lea.vmem %s0, %s195
        %s197 = smul.u32 4, %s17
      $region20: #{_lambda_.10} parent=15 // pred_fallthru
        _
      // Predicated region
      $region21: #{_lambda_.10} parent=15 // pred_check
        %p198 = pneg %p93
      $region22: #{_lambda_.10} parent=15 // pred_check_branch
        %200 = sbr.rel (%p198) target = $region24
      $region23: #{_lambda_.10} parent=15 // pred_region
        %p201 = scmp.lt.s32.totalorder %s19, %s18
        %s202 = scalar_select %p201, %s19, %s18
        %s203 = smul.u32 4, %s17
        %p204 = scmp.lt.s32.totalorder %s16, 1
        %s205 = scalar_select %p204, %s16, 1
        %p206 = scmp.lt.s32.totalorder %s203, 3
        %s207 = scalar_select %p206, %s203, 3
        %p208 = scmp.lt.s32.totalorder %s202, 0
        %s209 = scalar_select %p208, %s202, 0
        %s210 = sadd.s32 %s209, %s207
        %s211 = smul.addr %s205, 4
        %s212 = sadd.s32 %s210, %s211
        %s213 = smul.addr %s212, 8
        %s214 = scalar_lea.vmem %s1, %s213
        %p215 = scmp.lt.s32.totalorder %s19, %s18
        %s216 = scalar_select %p215, %s19, %s18
        %s217 = smul.u32 4, %s17
      $region24: #{_lambda_.10} parent=15 // pred_fallthru
        _
      // Predicated region
      $region25: #{_lambda_.10} parent=15 // pred_check
        %p218 = pneg %p127
      $region26: #{_lambda_.10} parent=15 // pred_check_branch
        %220 = sbr.rel (%p218) target = $region28
      $region27: #{_lambda_.10} parent=15 // pred_region
        %p221 = scmp.lt.s32.totalorder %s19, %s18
        %s222 = scalar_select %p221, %s19, %s18
        %s223 = smul.u32 4, %s17
        %p224 = scmp.lt.s32.totalorder %s16, 1
        %s225 = scalar_select %p224, %s16, 1
        %p226 = scmp.lt.s32.totalorder %s223, 3
        %s227 = scalar_select %p226, %s223, 3
        %p228 = scmp.lt.s32.totalorder %s222, 0
        %s229 = scalar_select %p228, %s222, 0
        %s230 = sadd.s32 %s229, %s227
        %s231 = smul.addr %s225, 4
        %s232 = sadd.s32 %s230, %s231
        %s233 = smul.addr %s232, 8
        %s234 = scalar_lea.vmem %s2, %s233
        %p235 = scmp.lt.s32.totalorder %s19, %s18
        %s236 = scalar_select %p235, %s19, %s18
        %s237 = smul.u32 4, %s17
      $region28: #{_lambda_.10} parent=15 // pred_fallthru
        _
    $region16: #{_lambda_.10} parent=5 // pred_fallthru
      _
    %p238 = scmp.le.s32.totalorder 1, %s9
    %p239 = scmp.lt.s32.totalorder %s9, 3
    %p240 = pnand %p238, %p239
    %p241 = pneg %p240
    // Predicated region
    $region29: #{_lambda_.10} parent=5 // pred_check
      _
    $region30: #{_lambda_.10} parent=5 // pred_check_branch
      %243 = sbr.rel (%p240) target = $region32
    $region31: #{_lambda_.10} parent=5 // pred_region
      %s244 = ssub.s32 %s9, 1
      %s245 = smul.u32 4, %s21
      %p246 = scmp.lt.s32.totalorder %s20, 1
      %s247 = scalar_select %p246, %s20, 1
      %p248 = scmp.lt.s32.totalorder %s245, 3
      %s249 = scalar_select %p248, %s245, 3
      %p250 = scmp.lt.s32.totalorder %s22, 0
      %s251 = scalar_select %p250, %s22, 0
      %s252 = sadd.s32 %s251, %s249
      %s253 = smul.addr %s247, 4
      %s254 = sadd.s32 %s252, %s253
      %s255 = smul.addr %s254, 8
      %s256 = scalar_lea.vmem %s0, %s255
      %p257 = pneg %p65
      %p258 = pneg %p62
      %p259 = scmp.lt.s32.totalorder %s23, %s22
      %s260 = scalar_select %p259, %s23, %s22
      %s261 = smul.u32 4, %s21
      %p262 = scmp.lt.s32.totalorder %s20, 1
      %s263 = scalar_select %p262, %s20, 1
      %p264 = scmp.lt.s32.totalorder %s261, 3
      %s265 = scalar_select %p264, %s261, 3
      %p266 = scmp.lt.s32.totalorder %s260, 0
      %s267 = scalar_select %p266, %s260, 0
      %s268 = sadd.s32 %s267, %s265
      %s269 = smul.addr %s263, 4
      %s270 = sadd.s32 %s268, %s269
      %s271 = smul.addr %s270, 8
      %s272 = scalar_lea.vmem %s1, %s271
      %p273 = pneg %p99
      %p274 = pneg %p96
      %p275 = scmp.lt.s32.totalorder %s23, %s22
      %s276 = scalar_select %p275, %s23, %s22
      %s277 = smul.u32 4, %s21
      %p278 = scmp.lt.s32.totalorder %s20, 1
      %s279 = scalar_select %p278, %s20, 1
      %p280 = scmp.lt.s32.totalorder %s277, 3
      %s281 = scalar_select %p280, %s277, 3
      %p282 = scmp.lt.s32.totalorder %s276, 0
      %s283 = scalar_select %p282, %s276, 0
      %s284 = sadd.s32 %s283, %s281
      %s285 = smul.addr %s279, 4
      %s286 = sadd.s32 %s284, %s285
      %s287 = smul.addr %s286, 8
      %s288 = scalar_lea.vmem %s2, %s287
      %p289 = pneg %p133
      %p290 = pneg %p130
      %p291 = pneg %p163
      %p292 = pneg %p160
      %s293 = smul.u32 4, %s21
      %p294 = scmp.lt.s32.totalorder %s20, 1
      %s295 = scalar_select %p294, %s20, 1
      %p296 = scmp.lt.s32.totalorder %s293, 3
      %s297 = scalar_select %p296, %s293, 3
      %p298 = scmp.lt.s32.totalorder %s22, 0
      %s299 = scalar_select %p298, %s22, 0
      %s300 = sadd.s32 %s299, %s297
      %s301 = smul.addr %s295, 4
      %s302 = sadd.s32 %s300, %s301
      %s303 = smul.addr %s302, 8
      %s304 = scalar_lea.vmem %s3, %s303
      %s305 = smul.u32 4, %s21
      %p306 = scmp.lt.s32.totalorder %s20, 1
      %s307 = scalar_select %p306, %s20, 1
      %p308 = scmp.lt.s32.totalorder %s305, 3
      %s309 = scalar_select %p308, %s305, 3
      %p310 = scmp.lt.s32.totalorder %s22, 0
      %s311 = scalar_select %p310, %s22, 0
      %s312 = sadd.s32 %s311, %s309
      %s313 = smul.addr %s307, 4
      %s314 = sadd.s32 %s312, %s313
      %s315 = smul.addr %s314, 8
      %s316 = scalar_lea.vmem %s0, %s315
      %s317 = smul.u32 4, %s21
      %p318 = scmp.lt.s32.totalorder %s23, %s22
      %s319 = scalar_select %p318, %s23, %s22
      %s320 = smul.u32 4, %s21
      %p321 = scmp.lt.s32.totalorder %s20, 1
      %s322 = scalar_select %p321, %s20, 1
      %p323 = scmp.lt.s32.totalorder %s320, 3
      %s324 = scalar_select %p323, %s320, 3
      %p325 = scmp.lt.s32.totalorder %s319, 0
      %s326 = scalar_select %p325, %s319, 0
      %s327 = sadd.s32 %s326, %s324
      %s328 = smul.addr %s322, 4
      %s329 = sadd.s32 %s327, %s328
      %s330 = smul.addr %s329, 8
      %s331 = scalar_lea.vmem %s1, %s330
      %p332 = scmp.lt.s32.totalorder %s23, %s22
      %s333 = scalar_select %p332, %s23, %s22
      %s334 = smul.u32 4, %s21
      %p335 = scmp.lt.s32.totalorder %s23, %s22
      %s336 = scalar_select %p335, %s23, %s22
      %s337 = smul.u32 4, %s21
      %p338 = scmp.lt.s32.totalorder %s20, 1
      %s339 = scalar_select %p338, %s20, 1
      %p340 = scmp.lt.s32.totalorder %s337, 3
      %s341 = scalar_select %p340, %s337, 3
      %p342 = scmp.lt.s32.totalorder %s336, 0
      %s343 = scalar_select %p342, %s336, 0
      %s344 = sadd.s32 %s343, %s341
      %s345 = smul.addr %s339, 4
      %s346 = sadd.s32 %s344, %s345
      %s347 = smul.addr %s346, 8
      %s348 = scalar_lea.vmem %s2, %s347
      %p349 = scmp.lt.s32.totalorder %s23, %s22
      %s350 = scalar_select %p349, %s23, %s22
      %s351 = smul.u32 4, %s21
      %s352 = smul.u32 4, %s21
      %p353 = scmp.lt.s32.totalorder %s20, 1
      %s354 = scalar_select %p353, %s20, 1
      %p355 = scmp.lt.s32.totalorder %s352, 3
      %s356 = scalar_select %p355, %s352, 3
      %p357 = scmp.lt.s32.totalorder %s22, 0
      %s358 = scalar_select %p357, %s22, 0
      %s359 = sadd.s32 %s358, %s356
      %s360 = smul.addr %s354, 4
      %s361 = sadd.s32 %s359, %s360
      %s362 = smul.addr %s361, 8
      %s363 = scalar_lea.vmem %s3, %s362
      %s364 = smul.u32 4, %s21
      %p365 = scmp.eq.s32.totalorder %s23, 0
      // Predicated region
      $region33: #{_lambda_.10} parent=31 // pred_check
        %p366 = pneg %p365
      $region34: #{_lambda_.10} parent=31 // pred_check_branch
        %368 = sbr.rel (%p366) target = $region36
      $region35: #{_lambda_.10} parent=31 // pred_region
        %v369 = vld [vmem:[%s316] sm:$0xff]
        %v370 = vld [vmem:[%s316 + $0x8] sm:$0xff]
        %v371 = vld [vmem:[%s316 + $0x10] sm:$0xff]
        %v372 = vld [vmem:[%s316 + $0x18] sm:$0xff]
        %v373 = vmul.f32 %v369, 0.25
        %v374 = vmul.f32 %v370, 0.25
        %v375 = vmul.f32 %v371, 0.25
        %v376 = vmul.f32 %v372, 0.25
        %vm377 = vcmask 130048
        %378 = vst.msk [vmem:[#allocation2] sm:$0xff] %vm377, %v373
        %379 = vst.msk [vmem:[#allocation2 + $0x8] sm:$0xff] %vm377, %v374
        %380 = vst.msk [vmem:[#allocation2 + $0x10] sm:$0xff] %vm377, %v375
        %381 = vst.msk [vmem:[#allocation2 + $0x18] sm:$0xff] %vm377, %v376
        %vm382 = vcmask 7168
        %383 = vst.msk [vmem:[#allocation3] sm:$0xff] %vm382, -1e+30
        %384 = vst.msk [vmem:[#allocation3 + $0x8] sm:$0xff] %vm382, -1e+30
        %385 = vst.msk [vmem:[#allocation3 + $0x10] sm:$0xff] %vm382, -1e+30
        %386 = vst.msk [vmem:[#allocation3 + $0x18] sm:$0xff] %vm382, -1e+30
        %387 = vst.msk [vmem:[#allocation4] sm:$0xff] %vm382, 0.0
        %388 = vst.msk [vmem:[#allocation4 + $0x8] sm:$0xff] %vm382, 0.0
        %389 = vst.msk [vmem:[#allocation4 + $0x10] sm:$0xff] %vm382, 0.0
        %390 = vst.msk [vmem:[#allocation4 + $0x18] sm:$0xff] %vm382, 0.0
        %391 = vst.msk [vmem:[#allocation5] sm:$0xff] %vm377, 0.0
        %392 = vst.msk [vmem:[#allocation5 + $0x8] sm:$0xff] %vm377, 0.0
        %393 = vst.msk [vmem:[#allocation5 + $0x10] sm:$0xff] %vm377, 0.0
        %394 = vst.msk [vmem:[#allocation5 + $0x18] sm:$0xff] %vm377, 0.0
      $region36: #{_lambda_.10} parent=31 // pred_fallthru
        _
      %p395 = scmp.lt.s32.totalorder %s23, %s22
      // Predicated region
      $region37: #{_lambda_.10} parent=31 // pred_check
        %p396 = pneg %p395
      $region38: #{_lambda_.10} parent=31 // pred_check_branch
        %398 = sbr.rel (%p396) target = $region40
      $region39: #{_lambda_.10} parent=31 // pred_region
        %v399 = vld [vmem:[#allocation2] sm:$0xff]
        %v400 = vld [vmem:[#allocation2 + $0x8] sm:$0xff]
        %v401 = vld [vmem:[#allocation2 + $0x10] sm:$0xff]
        %v402 = vld [vmem:[#allocation2 + $0x18] sm:$0xff]
        %v403 = vld [vmem:[%s331] sm:$0xff]
        %v404 = vld [vmem:[%s331 + $0x8] sm:$0xff]
        %v405 = vld [vmem:[%s331 + $0x10] sm:$0xff]
        %v406 = vld [vmem:[%s331 + $0x18] sm:$0xff]
        %vm407 = vcmask 130048
        %v409 = vsel %vm407, %v399, 0
        %v412 = vsel %vm407, %v403, 0
        %414 = vmatpush.xpose.msra.mxu0 0.0
        %415 = vmatpush.xpose.msra.mxu0 0.0
        %416 = vmatpush.xpose.msra.mxu0 0.0
        %417 = vmatpush.xpose.msra.mxu0 0.0
        %418 = vmatpush.xpose.msra.mxu0 0.0
        %419 = vmatpush.xpose.msra.mxu0 0.0
        %420 = vmatpush.xpose.msra.mxu0 0.0
        %421 = vmatpush.xpose.msra.mxu0 0.0
        %422 = vmatpush.xpose.msra.mxu0 0.0
        %423 = vmatpush.xpose.msra.mxu0 0.0
        %424 = vmatpush.xpose.msra.mxu0 0.0
        %425 = vmatpush.xpose.msra.mxu0 0.0
        %426 = vmatpush.xpose.msra.mxu0 0.0
        %427 = vmatpush.xpose.msra.mxu0 0.0
        %428 = vmatpush.xpose.msra.mxu0 0.0
        %429 = vmatpush.xpose.msra.mxu0 %v412
        %430 = vmatmul.f32.gmra.mxu0 %v409
        %v431 = vpop.f32.mrf.mxu0
        %v432 = vadd.f32 0.0, %v431
        %433 = vdwg.mxu0
        %v435 = vsel %vm407, %v400, 0
        %v438 = vsel %vm407, %v404, 0
        %440 = vmatpush.xpose.msra.mxu0 0.0
        %441 = vmatpush.xpose.msra.mxu0 0.0
        %442 = vmatpush.xpose.msra.mxu0 0.0
        %443 = vmatpush.xpose.msra.mxu0 0.0
        %444 = vmatpush.xpose.msra.mxu0 0.0
        %445 = vmatpush.xpose.msra.mxu0 0.0
        %446 = vmatpush.xpose.msra.mxu0 0.0
        %447 = vmatpush.xpose.msra.mxu0 0.0
        %448 = vmatpush.xpose.msra.mxu0 0.0
        %449 = vmatpush.xpose.msra.mxu0 0.0
        %450 = vmatpush.xpose.msra.mxu0 0.0
        %451 = vmatpush.xpose.msra.mxu0 0.0
        %452 = vmatpush.xpose.msra.mxu0 0.0
        %453 = vmatpush.xpose.msra.mxu0 0.0
        %454 = vmatpush.xpose.msra.mxu0 0.0
        %455 = vmatpush.xpose.msra.mxu0 %v438
        %456 = vmatmul.f32.gmra.mxu0 %v435
        %v457 = vpop.f32.mrf.mxu0
        %v458 = vadd.f32 0.0, %v457
        %459 = vdwg.mxu0
        %v461 = vsel %vm407, %v401, 0
        %v464 = vsel %vm407, %v405, 0
        %466 = vmatpush.xpose.msra.mxu0 0.0
        %467 = vmatpush.xpose.msra.mxu0 0.0
        %468 = vmatpush.xpose.msra.mxu0 0.0
        %469 = vmatpush.xpose.msra.mxu0 0.0
        %470 = vmatpush.xpose.msra.mxu0 0.0
        %471 = vmatpush.xpose.msra.mxu0 0.0
        %472 = vmatpush.xpose.msra.mxu0 0.0
        %473 = vmatpush.xpose.msra.mxu0 0.0
        %474 = vmatpush.xpose.msra.mxu0 0.0
        %475 = vmatpush.xpose.msra.mxu0 0.0
        %476 = vmatpush.xpose.msra.mxu0 0.0
        %477 = vmatpush.xpose.msra.mxu0 0.0
        %478 = vmatpush.xpose.msra.mxu0 0.0
        %479 = vmatpush.xpose.msra.mxu0 0.0
        %480 = vmatpush.xpose.msra.mxu0 0.0
        %481 = vmatpush.xpose.msra.mxu0 %v464
        %482 = vmatmul.f32.gmra.mxu0 %v461
        %v483 = vpop.f32.mrf.mxu0
        %v484 = vadd.f32 0.0, %v483
        %485 = vdwg.mxu0
        %v487 = vsel %vm407, %v402, 0
        %v490 = vsel %vm407, %v406, 0
        %492 = vmatpush.xpose.msra.mxu0 0.0
        %493 = vmatpush.xpose.msra.mxu0 0.0
        %494 = vmatpush.xpose.msra.mxu0 0.0
        %495 = vmatpush.xpose.msra.mxu0 0.0
        %496 = vmatpush.xpose.msra.mxu0 0.0
        %497 = vmatpush.xpose.msra.mxu0 0.0
        %498 = vmatpush.xpose.msra.mxu0 0.0
        %499 = vmatpush.xpose.msra.mxu0 0.0
        %500 = vmatpush.xpose.msra.mxu0 0.0
        %501 = vmatpush.xpose.msra.mxu0 0.0
        %502 = vmatpush.xpose.msra.mxu0 0.0
        %503 = vmatpush.xpose.msra.mxu0 0.0
        %504 = vmatpush.xpose.msra.mxu0 0.0
        %505 = vmatpush.xpose.msra.mxu0 0.0
        %506 = vmatpush.xpose.msra.mxu0 0.0
        %507 = vmatpush.xpose.msra.mxu0 %v490
        %508 = vmatmul.f32.gmra.mxu0 %v487
        %v509 = vpop.f32.mrf.mxu0
        %v510 = vadd.f32 0.0, %v509
        %511 = vdwg.mxu0
        %v512 = vld [vmem:[#allocation3] sm:$0xff]
        %v513 = vld [vmem:[#allocation3 + $0x8] sm:$0xff]
        %v514 = vld [vmem:[#allocation3 + $0x10] sm:$0xff]
        %v515 = vld [vmem:[#allocation3 + $0x18] sm:$0xff]
        %vm516 = vcmask 64512
        %v517 = vsel %vm516, %v432, -inf
        %518 = vmax.xlane.f32.xlu0 %v517
        %v519 = vpop.xlane.xlu0 %518
        %v520 = vsel %vm516, %v458, -inf
        %521 = vmax.xlane.f32.xlu0 %v520
        %v522 = vpop.xlane.xlu0 %521
        %v523 = vsel %vm516, %v484, -inf
        %524 = vmax.xlane.f32.xlu0 %v523
        %v525 = vpop.xlane.xlu0 %524
        %v526 = vsel %vm516, %v510, -inf
        %527 = vmax.xlane.f32.xlu0 %v526
        %v528 = vpop.xlane.xlu0 %527
        %v529 = vmax.f32 %v512, %v519
        %v530 = vmax.f32 %v513, %v522
        %v531 = vmax.f32 %v514, %v525
        %v532 = vmax.f32 %v515, %v528
        %v533 = vsub.f32 %v512, %v529
        %v534 = vsub.f32 %v513, %v530
        %v535 = vsub.f32 %v514, %v531
        %v536 = vsub.f32 %v515, %v532
        %v537 = vmul.f32 %v533, 1.442695
        %v538 = vpow.pop %v537
        %v539 = vmul.f32 %v534, 1.442695
        %v540 = vpow.pop %v539
        %v541 = vmul.f32 %v535, 1.442695
        %v542 = vpow.pop %v541
        %v543 = vmul.f32 %v536, 1.442695
        %v544 = vpow.pop %v543
        %546 = vset.pattern.permute.xlu0 0
        %547 = vperm.xlu0 %546, %v529
        %v548 = vpop.permute.xlu0 %547
        %551 = vset.pattern.permute.xlu0 0
        %552 = vperm.xlu0 %551, %v530
        %v553 = vpop.permute.xlu0 %552
        %556 = vset.pattern.permute.xlu0 0
        %557 = vperm.xlu0 %556, %v531
        %v558 = vpop.permute.xlu0 %557
        %561 = vset.pattern.permute.xlu0 0
        %562 = vperm.xlu0 %561, %v532
        %v563 = vpop.permute.xlu0 %562
        %v565 = vsub.f32 %v432, %v548
        %v566 = vsub.f32 %v458, %v553
        %v567 = vsub.f32 %v484, %v558
        %v568 = vsub.f32 %v510, %v563
        %v569 = vmul.f32 %v565, 1.442695
        %v570 = vpow.pop %v569
        %v571 = vmul.f32 %v566, 1.442695
        %v572 = vpow.pop %v571
        %v573 = vmul.f32 %v567, 1.442695
        %v574 = vpow.pop %v573
        %v575 = vmul.f32 %v568, 1.442695
        %v576 = vpow.pop %v575
        %v577 = vld [vmem:[#allocation4] sm:$0xff]
        %v578 = vld [vmem:[#allocation4 + $0x8] sm:$0xff]
        %v579 = vld [vmem:[#allocation4 + $0x10] sm:$0xff]
        %v580 = vld [vmem:[#allocation4 + $0x18] sm:$0xff]
        %v581 = vmul.f32 %v538, %v577
        %v582 = vmul.f32 %v540, %v578
        %v583 = vmul.f32 %v542, %v579
        %v584 = vmul.f32 %v544, %v580
        %v585 = vsel %vm516, %v570, 0.0
        %586 = vadd.xlane.f32.xlu0 %v585
        %v587 = vpop.xlane.xlu0 %586
        %v588 = vsel %vm516, %v572, 0.0
        %589 = vadd.xlane.f32.xlu0 %v588
        %v590 = vpop.xlane.xlu0 %589
        %v591 = vsel %vm516, %v574, 0.0
        %592 = vadd.xlane.f32.xlu0 %v591
        %v593 = vpop.xlane.xlu0 %592
        %v594 = vsel %vm516, %v576, 0.0
        %595 = vadd.xlane.f32.xlu0 %v594
        %v596 = vpop.xlane.xlu0 %595
        %v597 = vadd.f32 %v581, %v587
        %v598 = vadd.f32 %v582, %v590
        %v599 = vadd.f32 %v583, %v593
        %v600 = vadd.f32 %v584, %v596
        %vm601 = vcmask 7168
        %602 = vst.msk [vmem:[#allocation4] sm:$0xff] %vm601, %v597
        %603 = vst.msk [vmem:[#allocation4 + $0x8] sm:$0xff] %vm601, %v598
        %604 = vst.msk [vmem:[#allocation4 + $0x10] sm:$0xff] %vm601, %v599
        %605 = vst.msk [vmem:[#allocation4 + $0x18] sm:$0xff] %vm601, %v600
        %v606 = vld [vmem:[#allocation5] sm:$0xff]
        %v607 = vld [vmem:[#allocation5 + $0x8] sm:$0xff]
        %v608 = vld [vmem:[#allocation5 + $0x10] sm:$0xff]
        %v609 = vld [vmem:[#allocation5 + $0x18] sm:$0xff]
        %611 = vset.pattern.permute.xlu0 0
        %612 = vperm.xlu0 %611, %v538
        %v613 = vpop.permute.xlu0 %612
        %616 = vset.pattern.permute.xlu0 0
        %617 = vperm.xlu0 %616, %v540
        %v618 = vpop.permute.xlu0 %617
        %621 = vset.pattern.permute.xlu0 0
        %622 = vperm.xlu0 %621, %v542
        %v623 = vpop.permute.xlu0 %622
        %626 = vset.pattern.permute.xlu0 0
        %627 = vperm.xlu0 %626, %v544
        %v628 = vpop.permute.xlu0 %627
        %v630 = vmul.f32 %v613, %v606
        %v631 = vmul.f32 %v618, %v607
        %v632 = vmul.f32 %v623, %v608
        %v633 = vmul.f32 %v628, %v609
        %v634 = vld [vmem:[%s348] sm:$0xff]
        %v635 = vld [vmem:[%s348 + $0x8] sm:$0xff]
        %v636 = vld [vmem:[%s348 + $0x10] sm:$0xff]
        %v637 = vld [vmem:[%s348 + $0x18] sm:$0xff]
        %v639 = vsel %vm516, %v570, 0
        %641 = vmatpush.msra.mxu0 0.0
        %642 = vmatpush.msra.mxu0 0.0
        %643 = vmatpush.msra.mxu0 0.0
        %644 = vmatpush.msra.mxu0 0.0
        %645 = vmatpush.msra.mxu0 0.0
        %646 = vmatpush.msra.mxu0 0.0
        %647 = vmatpush.msra.mxu0 0.0
        %648 = vmatpush.msra.mxu0 0.0
        %649 = vmatpush.msra.mxu0 0.0
        %650 = vmatpush.msra.mxu0 0.0
        %651 = vmatpush.msra.mxu0 0.0
        %652 = vmatpush.msra.mxu0 0.0
        %653 = vmatpush.msra.mxu0 0.0
        %654 = vmatpush.msra.mxu0 0.0
        %655 = vmatpush.msra.mxu0 0.0
        %656 = vmatpush.msra.mxu0 %v634
        %657 = vmatmul.f32.gmra.mxu0 %v639
        %v658 = vpop.f32.mrf.mxu0
        %v659 = vadd.f32 0.0, %v658
        %660 = vdwg.mxu0
        %v662 = vsel %vm516, %v572, 0
        %664 = vmatpush.msra.mxu0 0.0
        %665 = vmatpush.msra.mxu0 0.0
        %666 = vmatpush.msra.mxu0 0.0
        %667 = vmatpush.msra.mxu0 0.0
        %668 = vmatpush.msra.mxu0 0.0
        %669 = vmatpush.msra.mxu0 0.0
        %670 = vmatpush.msra.mxu0 0.0
        %671 = vmatpush.msra.mxu0 0.0
        %672 = vmatpush.msra.mxu0 0.0
        %673 = vmatpush.msra.mxu0 0.0
        %674 = vmatpush.msra.mxu0 0.0
        %675 = vmatpush.msra.mxu0 0.0
        %676 = vmatpush.msra.mxu0 0.0
        %677 = vmatpush.msra.mxu0 0.0
        %678 = vmatpush.msra.mxu0 0.0
        %679 = vmatpush.msra.mxu0 %v635
        %680 = vmatmul.f32.gmra.mxu0 %v662
        %v681 = vpop.f32.mrf.mxu0
        %v682 = vadd.f32 0.0, %v681
        %683 = vdwg.mxu0
        %v685 = vsel %vm516, %v574, 0
        %687 = vmatpush.msra.mxu0 0.0
        %688 = vmatpush.msra.mxu0 0.0
        %689 = vmatpush.msra.mxu0 0.0
        %690 = vmatpush.msra.mxu0 0.0
        %691 = vmatpush.msra.mxu0 0.0
        %692 = vmatpush.msra.mxu0 0.0
        %693 = vmatpush.msra.mxu0 0.0
        %694 = vmatpush.msra.mxu0 0.0
        %695 = vmatpush.msra.mxu0 0.0
        %696 = vmatpush.msra.mxu0 0.0
        %697 = vmatpush.msra.mxu0 0.0
        %698 = vmatpush.msra.mxu0 0.0
        %699 = vmatpush.msra.mxu0 0.0
        %700 = vmatpush.msra.mxu0 0.0
        %701 = vmatpush.msra.mxu0 0.0
        %702 = vmatpush.msra.mxu0 %v636
        %703 = vmatmul.f32.gmra.mxu0 %v685
        %v704 = vpop.f32.mrf.mxu0
        %v705 = vadd.f32 0.0, %v704
        %706 = vdwg.mxu0
        %v708 = vsel %vm516, %v576, 0
        %710 = vmatpush.msra.mxu0 0.0
        %711 = vmatpush.msra.mxu0 0.0
        %712 = vmatpush.msra.mxu0 0.0
        %713 = vmatpush.msra.mxu0 0.0
        %714 = vmatpush.msra.mxu0 0.0
        %715 = vmatpush.msra.mxu0 0.0
        %716 = vmatpush.msra.mxu0 0.0
        %717 = vmatpush.msra.mxu0 0.0
        %718 = vmatpush.msra.mxu0 0.0
        %719 = vmatpush.msra.mxu0 0.0
        %720 = vmatpush.msra.mxu0 0.0
        %721 = vmatpush.msra.mxu0 0.0
        %722 = vmatpush.msra.mxu0 0.0
        %723 = vmatpush.msra.mxu0 0.0
        %724 = vmatpush.msra.mxu0 0.0
        %725 = vmatpush.msra.mxu0 %v637
        %726 = vmatmul.f32.gmra.mxu0 %v708
        %v727 = vpop.f32.mrf.mxu0
        %v728 = vadd.f32 0.0, %v727
        %729 = vdwg.mxu0
        %v730 = vadd.f32 %v630, %v659
        %v731 = vadd.f32 %v631, %v682
        %v732 = vadd.f32 %v632, %v705
        %v733 = vadd.f32 %v633, %v728
        %734 = vst.msk [vmem:[#allocation5] sm:$0xff] %vm407, %v730
        %735 = vst.msk [vmem:[#allocation5 + $0x8] sm:$0xff] %vm407, %v731
        %736 = vst.msk [vmem:[#allocation5 + $0x10] sm:$0xff] %vm407, %v732
        %737 = vst.msk [vmem:[#allocation5 + $0x18] sm:$0xff] %vm407, %v733
        %738 = vst.msk [vmem:[#allocation3] sm:$0xff] %vm601, %v529
        %739 = vst.msk [vmem:[#allocation3 + $0x8] sm:$0xff] %vm601, %v530
        %740 = vst.msk [vmem:[#allocation3 + $0x10] sm:$0xff] %vm601, %v531
        %741 = vst.msk [vmem:[#allocation3 + $0x18] sm:$0xff] %vm601, %v532
      $region40: #{_lambda_.10} parent=31 // pred_fallthru
        _
      %p742 = scmp.eq.s32.totalorder %s23, %s22
      // Predicated region
      $region41: #{_lambda_.10} parent=31 // pred_check
        %p743 = pneg %p742
      $region42: #{_lambda_.10} parent=31 // pred_check_branch
        %745 = sbr.rel (%p743) target = $region44
      $region43: #{_lambda_.10} parent=31 // pred_region
        %v746 = vld [vmem:[#allocation2] sm:$0xff]
        %v747 = vld [vmem:[#allocation2 + $0x8] sm:$0xff]
        %v748 = vld [vmem:[#allocation2 + $0x10] sm:$0xff]
        %v749 = vld [vmem:[#allocation2 + $0x18] sm:$0xff]
        %v750 = vld [vmem:[%s331] sm:$0xff]
        %v751 = vld [vmem:[%s331 + $0x8] sm:$0xff]
        %v752 = vld [vmem:[%s331 + $0x10] sm:$0xff]
        %v753 = vld [vmem:[%s331 + $0x18] sm:$0xff]
        %vm754 = vcmask 130048
        %v756 = vsel %vm754, %v746, 0
        %v759 = vsel %vm754, %v750, 0
        %761 = vmatpush.xpose.msra.mxu0 0.0
        %762 = vmatpush.xpose.msra.mxu0 0.0
        %763 = vmatpush.xpose.msra.mxu0 0.0
        %764 = vmatpush.xpose.msra.mxu0 0.0
        %765 = vmatpush.xpose.msra.mxu0 0.0
        %766 = vmatpush.xpose.msra.mxu0 0.0
        %767 = vmatpush.xpose.msra.mxu0 0.0
        %768 = vmatpush.xpose.msra.mxu0 0.0
        %769 = vmatpush.xpose.msra.mxu0 0.0
        %770 = vmatpush.xpose.msra.mxu0 0.0
        %771 = vmatpush.xpose.msra.mxu0 0.0
        %772 = vmatpush.xpose.msra.mxu0 0.0
        %773 = vmatpush.xpose.msra.mxu0 0.0
        %774 = vmatpush.xpose.msra.mxu0 0.0
        %775 = vmatpush.xpose.msra.mxu0 0.0
        %776 = vmatpush.xpose.msra.mxu0 %v759
        %777 = vmatmul.f32.gmra.mxu0 %v756
        %v778 = vpop.f32.mrf.mxu0
        %v779 = vadd.f32 0.0, %v778
        %780 = vdwg.mxu0
        %v782 = vsel %vm754, %v747, 0
        %v785 = vsel %vm754, %v751, 0
        %787 = vmatpush.xpose.msra.mxu0 0.0
        %788 = vmatpush.xpose.msra.mxu0 0.0
        %789 = vmatpush.xpose.msra.mxu0 0.0
        %790 = vmatpush.xpose.msra.mxu0 0.0
        %791 = vmatpush.xpose.msra.mxu0 0.0
        %792 = vmatpush.xpose.msra.mxu0 0.0
        %793 = vmatpush.xpose.msra.mxu0 0.0
        %794 = vmatpush.xpose.msra.mxu0 0.0
        %795 = vmatpush.xpose.msra.mxu0 0.0
        %796 = vmatpush.xpose.msra.mxu0 0.0
        %797 = vmatpush.xpose.msra.mxu0 0.0
        %798 = vmatpush.xpose.msra.mxu0 0.0
        %799 = vmatpush.xpose.msra.mxu0 0.0
        %800 = vmatpush.xpose.msra.mxu0 0.0
        %801 = vmatpush.xpose.msra.mxu0 0.0
        %802 = vmatpush.xpose.msra.mxu0 %v785
        %803 = vmatmul.f32.gmra.mxu0 %v782
        %v804 = vpop.f32.mrf.mxu0
        %v805 = vadd.f32 0.0, %v804
        %806 = vdwg.mxu0
        %v808 = vsel %vm754, %v748, 0
        %v811 = vsel %vm754, %v752, 0
        %813 = vmatpush.xpose.msra.mxu0 0.0
        %814 = vmatpush.xpose.msra.mxu0 0.0
        %815 = vmatpush.xpose.msra.mxu0 0.0
        %816 = vmatpush.xpose.msra.mxu0 0.0
        %817 = vmatpush.xpose.msra.mxu0 0.0
        %818 = vmatpush.xpose.msra.mxu0 0.0
        %819 = vmatpush.xpose.msra.mxu0 0.0
        %820 = vmatpush.xpose.msra.mxu0 0.0
        %821 = vmatpush.xpose.msra.mxu0 0.0
        %822 = vmatpush.xpose.msra.mxu0 0.0
        %823 = vmatpush.xpose.msra.mxu0 0.0
        %824 = vmatpush.xpose.msra.mxu0 0.0
        %825 = vmatpush.xpose.msra.mxu0 0.0
        %826 = vmatpush.xpose.msra.mxu0 0.0
        %827 = vmatpush.xpose.msra.mxu0 0.0
        %828 = vmatpush.xpose.msra.mxu0 %v811
        %829 = vmatmul.f32.gmra.mxu0 %v808
        %v830 = vpop.f32.mrf.mxu0
        %v831 = vadd.f32 0.0, %v830
        %832 = vdwg.mxu0
        %v834 = vsel %vm754, %v749, 0
        %v837 = vsel %vm754, %v753, 0
        %839 = vmatpush.xpose.msra.mxu0 0.0
        %840 = vmatpush.xpose.msra.mxu0 0.0
        %841 = vmatpush.xpose.msra.mxu0 0.0
        %842 = vmatpush.xpose.msra.mxu0 0.0
        %843 = vmatpush.xpose.msra.mxu0 0.0
        %844 = vmatpush.xpose.msra.mxu0 0.0
        %845 = vmatpush.xpose.msra.mxu0 0.0
        %846 = vmatpush.xpose.msra.mxu0 0.0
        %847 = vmatpush.xpose.msra.mxu0 0.0
        %848 = vmatpush.xpose.msra.mxu0 0.0
        %849 = vmatpush.xpose.msra.mxu0 0.0
        %850 = vmatpush.xpose.msra.mxu0 0.0
        %851 = vmatpush.xpose.msra.mxu0 0.0
        %852 = vmatpush.xpose.msra.mxu0 0.0
        %853 = vmatpush.xpose.msra.mxu0 0.0
        %854 = vmatpush.xpose.msra.mxu0 %v837
        %855 = vmatmul.f32.gmra.mxu0 %v834
        %v856 = vpop.f32.mrf.mxu0
        %v857 = vadd.f32 0.0, %v856
        %858 = vdwg.mxu0
        %v859 = vlaneseq
        %v860 = vshrl.u32 %v859, 7
        %v861 = vlaneseq
        %v862 = vand.u32 %v861, 127
        %vm863 = vcmp.le.s32.totalorder %v862, %v860
        %v864 = vsel %vm863, 1, 0
        %vm865 = vcmp.eq.s32.totalorder %v864, 1
        %v866 = vsel %vm865, %v779, -1e+30
        %v867 = vsel %vm865, %v805, -1e+30
        %v868 = vsel %vm865, %v831, -1e+30
        %v869 = vsel %vm865, %v857, -1e+30
        %v870 = vld [vmem:[#allocation3] sm:$0xff]
        %v871 = vld [vmem:[#allocation3 + $0x8] sm:$0xff]
        %v872 = vld [vmem:[#allocation3 + $0x10] sm:$0xff]
        %v873 = vld [vmem:[#allocation3 + $0x18] sm:$0xff]
        %vm874 = vcmask 64512
        %v875 = vsel %vm874, %v866, -inf
        %876 = vmax.xlane.f32.xlu0 %v875
        %v877 = vpop.xlane.xlu0 %876
        %v878 = vsel %vm874, %v867, -inf
        %879 = vmax.xlane.f32.xlu0 %v878
        %v880 = vpop.xlane.xlu0 %879
        %v881 = vsel %vm874, %v868, -inf
        %882 = vmax.xlane.f32.xlu0 %v881
        %v883 = vpop.xlane.xlu0 %882
        %v884 = vsel %vm874, %v869, -inf
        %885 = vmax.xlane.f32.xlu0 %v884
        %v886 = vpop.xlane.xlu0 %885
        %v887 = vmax.f32 %v870, %v877
        %v888 = vmax.f32 %v871, %v880
        %v889 = vmax.f32 %v872, %v883
        %v890 = vmax.f32 %v873, %v886
        %v891 = vsub.f32 %v870, %v887
        %v892 = vsub.f32 %v871, %v888
        %v893 = vsub.f32 %v872, %v889
        %v894 = vsub.f32 %v873, %v890
        %v895 = vmul.f32 %v891, 1.442695
        %v896 = vpow.pop %v895
        %v897 = vmul.f32 %v892, 1.442695
        %v898 = vpow.pop %v897
        %v899 = vmul.f32 %v893, 1.442695
        %v900 = vpow.pop %v899
        %v901 = vmul.f32 %v894, 1.442695
        %v902 = vpow.pop %v901
        %904 = vset.pattern.permute.xlu0 0
        %905 = vperm.xlu0 %904, %v887
        %v906 = vpop.permute.xlu0 %905
        %909 = vset.pattern.permute.xlu0 0
        %910 = vperm.xlu0 %909, %v888
        %v911 = vpop.permute.xlu0 %910
        %914 = vset.pattern.permute.xlu0 0
        %915 = vperm.xlu0 %914, %v889
        %v916 = vpop.permute.xlu0 %915
        %919 = vset.pattern.permute.xlu0 0
        %920 = vperm.xlu0 %919, %v890
        %v921 = vpop.permute.xlu0 %920
        %v923 = vsub.f32 %v866, %v906
        %v924 = vsub.f32 %v867, %v911
        %v925 = vsub.f32 %v868, %v916
        %v926 = vsub.f32 %v869, %v921
        %v927 = vmul.f32 %v923, 1.442695
        %v928 = vpow.pop %v927
        %v929 = vmul.f32 %v924, 1.442695
        %v930 = vpow.pop %v929
        %v931 = vmul.f32 %v925, 1.442695
        %v932 = vpow.pop %v931
        %v933 = vmul.f32 %v926, 1.442695
        %v934 = vpow.pop %v933
        %v935 = vld [vmem:[#allocation4] sm:$0xff]
        %v936 = vld [vmem:[#allocation4 + $0x8] sm:$0xff]
        %v937 = vld [vmem:[#allocation4 + $0x10] sm:$0xff]
        %v938 = vld [vmem:[#allocation4 + $0x18] sm:$0xff]
        %v939 = vmul.f32 %v896, %v935
        %v940 = vmul.f32 %v898, %v936
        %v941 = vmul.f32 %v900, %v937
        %v942 = vmul.f32 %v902, %v938
        %v943 = vsel %vm874, %v928, 0.0
        %944 = vadd.xlane.f32.xlu0 %v943
        %v945 = vpop.xlane.xlu0 %944
        %v946 = vsel %vm874, %v930, 0.0
        %947 = vadd.xlane.f32.xlu0 %v946
        %v948 = vpop.xlane.xlu0 %947
        %v949 = vsel %vm874, %v932, 0.0
        %950 = vadd.xlane.f32.xlu0 %v949
        %v951 = vpop.xlane.xlu0 %950
        %v952 = vsel %vm874, %v934, 0.0
        %953 = vadd.xlane.f32.xlu0 %v952
        %v954 = vpop.xlane.xlu0 %953
        %v955 = vadd.f32 %v939, %v945
        %v956 = vadd.f32 %v940, %v948
        %v957 = vadd.f32 %v941, %v951
        %v958 = vadd.f32 %v942, %v954
        %vm959 = vcmask 7168
        %960 = vst.msk [vmem:[#allocation4] sm:$0xff] %vm959, %v955
        %961 = vst.msk [vmem:[#allocation4 + $0x8] sm:$0xff] %vm959, %v956
        %962 = vst.msk [vmem:[#allocation4 + $0x10] sm:$0xff] %vm959, %v957
        %963 = vst.msk [vmem:[#allocation4 + $0x18] sm:$0xff] %vm959, %v958
        %v964 = vld [vmem:[#allocation5] sm:$0xff]
        %v965 = vld [vmem:[#allocation5 + $0x8] sm:$0xff]
        %v966 = vld [vmem:[#allocation5 + $0x10] sm:$0xff]
        %v967 = vld [vmem:[#allocation5 + $0x18] sm:$0xff]
        %969 = vset.pattern.permute.xlu0 0
        %970 = vperm.xlu0 %969, %v896
        %v971 = vpop.permute.xlu0 %970
        %974 = vset.pattern.permute.xlu0 0
        %975 = vperm.xlu0 %974, %v898
        %v976 = vpop.permute.xlu0 %975
        %979 = vset.pattern.permute.xlu0 0
        %980 = vperm.xlu0 %979, %v900
        %v981 = vpop.permute.xlu0 %980
        %984 = vset.pattern.permute.xlu0 0
        %985 = vperm.xlu0 %984, %v902
        %v986 = vpop.permute.xlu0 %985
        %v988 = vmul.f32 %v971, %v964
        %v989 = vmul.f32 %v976, %v965
        %v990 = vmul.f32 %v981, %v966
        %v991 = vmul.f32 %v986, %v967
        %v992 = vld [vmem:[%s348] sm:$0xff]
        %v993 = vld [vmem:[%s348 + $0x8] sm:$0xff]
        %v994 = vld [vmem:[%s348 + $0x10] sm:$0xff]
        %v995 = vld [vmem:[%s348 + $0x18] sm:$0xff]
        %v997 = vsel %vm874, %v928, 0
        %999 = vmatpush.msra.mxu0 0.0
        %1000 = vmatpush.msra.mxu0 0.0
        %1001 = vmatpush.msra.mxu0 0.0
        %1002 = vmatpush.msra.mxu0 0.0
        %1003 = vmatpush.msra.mxu0 0.0
        %1004 = vmatpush.msra.mxu0 0.0
        %1005 = vmatpush.msra.mxu0 0.0
        %1006 = vmatpush.msra.mxu0 0.0
        %1007 = vmatpush.msra.mxu0 0.0
        %1008 = vmatpush.msra.mxu0 0.0
        %1009 = vmatpush.msra.mxu0 0.0
        %1010 = vmatpush.msra.mxu0 0.0
        %1011 = vmatpush.msra.mxu0 0.0
        %1012 = vmatpush.msra.mxu0 0.0
        %1013 = vmatpush.msra.mxu0 0.0
        %1014 = vmatpush.msra.mxu0 %v992
        %1015 = vmatmul.f32.gmra.mxu0 %v997
        %v1016 = vpop.f32.mrf.mxu0
        %v1017 = vadd.f32 0.0, %v1016
        %1018 = vdwg.mxu0
        %v1020 = vsel %vm874, %v930, 0
        %1022 = vmatpush.msra.mxu0 0.0
        %1023 = vmatpush.msra.mxu0 0.0
        %1024 = vmatpush.msra.mxu0 0.0
        %1025 = vmatpush.msra.mxu0 0.0
        %1026 = vmatpush.msra.mxu0 0.0
        %1027 = vmatpush.msra.mxu0 0.0
        %1028 = vmatpush.msra.mxu0 0.0
        %1029 = vmatpush.msra.mxu0 0.0
        %1030 = vmatpush.msra.mxu0 0.0
        %1031 = vmatpush.msra.mxu0 0.0
        %1032 = vmatpush.msra.mxu0 0.0
        %1033 = vmatpush.msra.mxu0 0.0
        %1034 = vmatpush.msra.mxu0 0.0
        %1035 = vmatpush.msra.mxu0 0.0
        %1036 = vmatpush.msra.mxu0 0.0
        %1037 = vmatpush.msra.mxu0 %v993
        %1038 = vmatmul.f32.gmra.mxu0 %v1020
        %v1039 = vpop.f32.mrf.mxu0
        %v1040 = vadd.f32 0.0, %v1039
        %1041 = vdwg.mxu0
        %v1043 = vsel %vm874, %v932, 0
        %1045 = vmatpush.msra.mxu0 0.0
        %1046 = vmatpush.msra.mxu0 0.0
        %1047 = vmatpush.msra.mxu0 0.0
        %1048 = vmatpush.msra.mxu0 0.0
        %1049 = vmatpush.msra.mxu0 0.0
        %1050 = vmatpush.msra.mxu0 0.0
        %1051 = vmatpush.msra.mxu0 0.0
        %1052 = vmatpush.msra.mxu0 0.0
        %1053 = vmatpush.msra.mxu0 0.0
        %1054 = vmatpush.msra.mxu0 0.0
        %1055 = vmatpush.msra.mxu0 0.0
        %1056 = vmatpush.msra.mxu0 0.0
        %1057 = vmatpush.msra.mxu0 0.0
        %1058 = vmatpush.msra.mxu0 0.0
        %1059 = vmatpush.msra.mxu0 0.0
        %1060 = vmatpush.msra.mxu0 %v994
        %1061 = vmatmul.f32.gmra.mxu0 %v1043
        %v1062 = vpop.f32.mrf.mxu0
        %v1063 = vadd.f32 0.0, %v1062
        %1064 = vdwg.mxu0
        %v1066 = vsel %vm874, %v934, 0
        %1068 = vmatpush.msra.mxu0 0.0
        %1069 = vmatpush.msra.mxu0 0.0
        %1070 = vmatpush.msra.mxu0 0.0
        %1071 = vmatpush.msra.mxu0 0.0
        %1072 = vmatpush.msra.mxu0 0.0
        %1073 = vmatpush.msra.mxu0 0.0
        %1074 = vmatpush.msra.mxu0 0.0
        %1075 = vmatpush.msra.mxu0 0.0
        %1076 = vmatpush.msra.mxu0 0.0
        %1077 = vmatpush.msra.mxu0 0.0
        %1078 = vmatpush.msra.mxu0 0.0
        %1079 = vmatpush.msra.mxu0 0.0
        %1080 = vmatpush.msra.mxu0 0.0
        %1081 = vmatpush.msra.mxu0 0.0
        %1082 = vmatpush.msra.mxu0 0.0
        %1083 = vmatpush.msra.mxu0 %v995
        %1084 = vmatmul.f32.gmra.mxu0 %v1066
        %v1085 = vpop.f32.mrf.mxu0
        %v1086 = vadd.f32 0.0, %v1085
        %1087 = vdwg.mxu0
        %v1088 = vadd.f32 %v988, %v1017
        %v1089 = vadd.f32 %v989, %v1040
        %v1090 = vadd.f32 %v990, %v1063
        %v1091 = vadd.f32 %v991, %v1086
        %1092 = vst.msk [vmem:[#allocation5] sm:$0xff] %vm754, %v1088
        %1093 = vst.msk [vmem:[#allocation5 + $0x8] sm:$0xff] %vm754, %v1089
        %1094 = vst.msk [vmem:[#allocation5 + $0x10] sm:$0xff] %vm754, %v1090
        %1095 = vst.msk [vmem:[#allocation5 + $0x18] sm:$0xff] %vm754, %v1091
        %1096 = vst.msk [vmem:[#allocation3] sm:$0xff] %vm959, %v887
        %1097 = vst.msk [vmem:[#allocation3 + $0x8] sm:$0xff] %vm959, %v888
        %1098 = vst.msk [vmem:[#allocation3 + $0x10] sm:$0xff] %vm959, %v889
        %1099 = vst.msk [vmem:[#allocation3 + $0x18] sm:$0xff] %vm959, %v890
      $region44: #{_lambda_.10} parent=31 // pred_fallthru
        _
      // Predicated region
      $region45: #{_lambda_.10} parent=31 // pred_check
        %p1100 = pneg %p365
      $region46: #{_lambda_.10} parent=31 // pred_check_branch
        %1102 = sbr.rel (%p1100) target = $region48
      $region47: #{_lambda_.10} parent=31 // pred_region
        %v1103 = vld [vmem:[#allocation5] sm:$0xff]
        %v1104 = vld [vmem:[#allocation5 + $0x8] sm:$0xff]
        %v1105 = vld [vmem:[#allocation5 + $0x10] sm:$0xff]
        %v1106 = vld [vmem:[#allocation5 + $0x18] sm:$0xff]
        %v1107 = vld [vmem:[#allocation4] sm:$0xff]
        %v1108 = vld [vmem:[#allocation4 + $0x8] sm:$0xff]
        %v1109 = vld [vmem:[#allocation4 + $0x10] sm:$0xff]
        %v1110 = vld [vmem:[#allocation4 + $0x18] sm:$0xff]
        %v1111 = vrcp.pop %v1107
        %v1112 = vrcp.pop %v1108
        %v1113 = vrcp.pop %v1109
        %v1114 = vrcp.pop %v1110
        %1116 = vset.pattern.permute.xlu0 0
        %1117 = vperm.xlu0 %1116, %v1111
        %v1118 = vpop.permute.xlu0 %1117
        %1121 = vset.pattern.permute.xlu0 0
        %1122 = vperm.xlu0 %1121, %v1112
        %v1123 = vpop.permute.xlu0 %1122
        %1126 = vset.pattern.permute.xlu0 0
        %1127 = vperm.xlu0 %1126, %v1113
        %v1128 = vpop.permute.xlu0 %1127
        %1131 = vset.pattern.permute.xlu0 0
        %1132 = vperm.xlu0 %1131, %v1114
        %v1133 = vpop.permute.xlu0 %1132
        %v1135 = vmul.f32 %v1103, %v1118
        %v1136 = vmul.f32 %v1104, %v1123
        %v1137 = vmul.f32 %v1105, %v1128
        %v1138 = vmul.f32 %v1106, %v1133
        %vm1139 = vcmask 130048
        %1140 = vst.msk [vmem:[%s363] sm:$0xff] %vm1139, %v1135
        %1141 = vst.msk [vmem:[%s363 + $0x8] sm:$0xff] %vm1139, %v1136
        %1142 = vst.msk [vmem:[%s363 + $0x10] sm:$0xff] %vm1139, %v1137
        %1143 = vst.msk [vmem:[%s363 + $0x18] sm:$0xff] %vm1139, %v1138
      $region48: #{_lambda_.10} parent=31 // pred_fallthru
        _
      %s1144 = smul.u32 4, %s21
      %p1145 = scmp.lt.s32.totalorder %s20, 1
      %s1146 = scalar_select %p1145, %s20, 1
      %p1147 = scmp.lt.s32.totalorder %s1144, 3
      %s1148 = scalar_select %p1147, %s1144, 3
      %p1149 = scmp.lt.s32.totalorder %s22, 0
      %s1150 = scalar_select %p1149, %s22, 0
      %s1151 = sadd.s32 %s1150, %s1148
      %s1152 = smul.addr %s1146, 4
      %s1153 = sadd.s32 %s1151, %s1152
      %s1154 = smul.addr %s1153, 8
      %s1155 = scalar_lea.vmem %s3, %s1154
      // Predicated region
      $region49: #{_lambda_.10} parent=31 // pred_check
        %p1156 = pneg %p160
      $region50: #{_lambda_.10} parent=31 // pred_check_branch
        %1158 = sbr.rel (%p1156) target = $region52
      $region51: #{_lambda_.10} parent=31 // pred_region
        %s1159 = smul.u32 4, %s21
      $region52: #{_lambda_.10} parent=31 // pred_fallthru
        _
    $region32: #{_lambda_.10} parent=5 // pred_fallthru
      _
    %p1160 = scmp.le.s32.totalorder 2, %s9
    // Predicated region
    $region53: #{_lambda_.10} parent=5 // pred_check
      %p1161 = pneg %p1160
    $region54: #{_lambda_.10} parent=5 // pred_check_branch
      %1163 = sbr.rel (%p1161) target = $region56
    $region55: #{_lambda_.10} parent=5 // pred_region
      %s1164 = ssub.s32 %s9, 2
      // Predicated region
      $region57: #{_lambda_.10} parent=55 // pred_check
        %p1165 = pneg %p166
      $region58: #{_lambda_.10} parent=55 // pred_check_branch
        %1167 = sbr.rel (%p1165) target = $region60
      $region59: #{_lambda_.10} parent=55 // pred_region
        %s1168 = smul.u32 4, %s25
        %p1169 = scmp.lt.s32.totalorder %s24, 1
        %s1170 = scalar_select %p1169, %s24, 1
        %p1171 = scmp.lt.s32.totalorder %s1168, 3
        %s1172 = scalar_select %p1171, %s1168, 3
        %p1173 = scmp.lt.s32.totalorder %s26, 0
        %s1174 = scalar_select %p1173, %s26, 0
        %s1175 = sadd.s32 %s1174, %s1172
        %s1176 = smul.addr %s1170, 4
        %s1177 = sadd.s32 %s1175, %s1176
        %s1178 = smul.addr %s1177, 8
        %s1179 = scalar_lea.vmem %s3, %s1178
      $region60: #{_lambda_.10} parent=55 // pred_fallthru
        _
    $region56: #{_lambda_.10} parent=5 // pred_fallthru
      _
  $region6: #{_lambda_.10} parent=0 // loop_footer
    %s13 = sadd.s32 1, %s9
  $region7: #{_lambda_.10} parent=0 // loop_footer_branch
    %8 = sbr.rel target = $region3
  $region8: #{_lambda_.10} parent=0 // loop_exit
    _

// kernel: _lambda_.12
$region0: #{_lambda_.12}
  #allocation0 [shape = 'u32[]', space=smem, size = 0x4, offset = 0x4, fixed_abs, tag = 'smem constant byte address 0x4 - core index']
  #allocation1 [shape = 'u32[72,128]{1,0:T(1,128)}', space=vmem, size = 0x9000, scoped, tag = 'internal scratch']
  #allocation2 [shape = 'f32[16,64]{1,0:T(8,128)}', space=vmem, size = 0x2000, scoped, tag = 'scratch operand']
  #allocation3 [shape = 'f32[16,64]{1,0:T(8,128)}', space=vmem, size = 0x2000, scoped, tag = 'scratch operand']
  %s0 = inlined_call_operand.vmem [shape: f32[16,64], index: 0, kind: input, shape index: {}]
  %s1 = inlined_call_operand.vmem [shape: f32[1,64], index: 1, kind: input, shape index: {}]
  %s2 = inlined_call_operand.vmem [shape: f32[2,64,192], index: 2, kind: input, shape index: {}]
  %s3 = inlined_call_operand.vmem [shape: f32[192,64], index: 3, kind: input, shape index: {}]
  %s4 = inlined_call_operand.vmem [shape: f32[16,64], index: 4, kind: output, shape index: {}]
  %s5 = sld [smem:[#allocation0]]
  $region34: #{_lambda_.12} parent=0
    _
  %s7 = ssub.s32 1, %s5
  %s8 = scalar_select 0, %s7, %s5
  // Predicated region
  $region2: #{_lambda_.12} parent=0 // pred_check
    _
  $region3: #{_lambda_.12} parent=0 // pred_check_branch
    %10 = sbr.rel (0) target = $region5
  $region4: #{_lambda_.12} parent=0 // pred_region
    _
  $region5: #{_lambda_.12} parent=0 // pred_fallthru
    _
  // Predicated region
  $region6: #{_lambda_.12} parent=0 // pred_check
    _
  $region7: #{_lambda_.12} parent=0 // pred_check_branch
    %12 = sbr.rel (0) target = $region9
  $region8: #{_lambda_.12} parent=0 // pred_region
    _
  $region9: #{_lambda_.12} parent=0 // pred_fallthru
    _
  // Predicated region
  $region10: #{_lambda_.12} parent=0 // pred_check
    _
  $region11: #{_lambda_.12} parent=0 // pred_check_branch
    %14 = sbr.rel (0) target = $region13
  $region12: #{_lambda_.12} parent=0 // pred_region
    _
  $region13: #{_lambda_.12} parent=0 // pred_fallthru
    _
  // Predicated region
  $region14: #{_lambda_.12} parent=0 // pred_check
    _
  $region15: #{_lambda_.12} parent=0 // pred_check_branch
    %16 = sbr.rel (0) target = $region17
  $region16: #{_lambda_.12} parent=0 // pred_region
    _
  $region17: #{_lambda_.12} parent=0 // pred_fallthru
    _
  %p17 = scmp.eq.s32.totalorder 0, 0
  // Predicated region
  $region18: #{_lambda_.12} parent=0 // pred_check
    %p18 = pneg %p17
  $region19: #{_lambda_.12} parent=0 // pred_check_branch
    %20 = sbr.rel (%p18) target = $region21
  $region20: #{_lambda_.12} parent=0 // pred_region
    %v21 = vld [vmem:[%s0] sm:$0xff]
    %v22 = vld [vmem:[%s0 + $0x8] sm:$0xff]
    %v23 = vmul.f32 %v21, %v21
    %v24 = vmul.f32 %v22, %v22
    %vm25 = vcmask 523264
    %v26 = vsel %vm25, %v23, 0.0
    %27 = vadd.xlane.f32.xlu0 %v26
    %v28 = vpop.xlane.xlu0 %27
    %v29 = vsel %vm25, %v24, 0.0
    %30 = vadd.xlane.f32.xlu0 %v29
    %v31 = vpop.xlane.xlu0 %30
    %v32 = vrcp.pop 64.0
    %v33 = vmul.f32 64.0, %v32
    %v34 = vsub.f32 1.0, %v33
    %v35 = vmul.f32 %v32, %v34
    %v36 = vadd.f32 %v32, %v35
    %vm37 = vweird.f32 %v32
    %v38 = vsel %vm37, %v32, %v36
    %v39 = vmul.f32 %v28, %v38
    %v40 = vmul.f32 %v31, %v38
    %v41 = vadd.f32 %v39, 1e-05
    %v42 = vadd.f32 %v40, 1e-05
    %v43 = vrsqrt.pop %v41
    %v44 = vmul.f32 %v43, %v41
    %v45 = vmul.f32 %v44, %v43
    %v46 = vmul.f32 0.5, %v45
    %v47 = vsub.f32 1.5, %v46
    %v48 = vmul.f32 %v43, %v47
    %vm49 = vweird.f32 %v41
    %vm50 = vweird.f32 %v43
    %vm51 = vmor %vm49, %vm50
    %v52 = vsel %vm51, %v43, %v48
    %v53 = vrsqrt.pop %v42
    %v54 = vmul.f32 %v53, %v42
    %v55 = vmul.f32 %v54, %v53
    %v56 = vmul.f32 0.5, %v55
    %v57 = vsub.f32 1.5, %v56
    %v58 = vmul.f32 %v53, %v57
    %vm59 = vweird.f32 %v42
    %vm60 = vweird.f32 %v53
    %vm61 = vmor %vm59, %vm60
    %v62 = vsel %vm61, %v53, %v58
    %v63 = vmul.f32 %v21, %v52
    %v64 = vmul.f32 %v22, %v62
    %v65 = vld [vmem:[%s1] sm:$0x1]
    %v67 = vperm.slane %v65, 0
    %v69 = vmul.f32 %v63, %v67
    %v70 = vmul.f32 %v64, %v67
    %71 = vst.msk [vmem:[#allocation3] sm:$0xff] %vm25, %v69
    %72 = vst.msk [vmem:[#allocation3 + $0x8] sm:$0xff] %vm25, %v70
    %73 = vst.msk [vmem:[#allocation2] sm:$0xff] %vm25, 0.0
    %74 = vst.msk [vmem:[#allocation2 + $0x8] sm:$0xff] %vm25, 0.0
  $region21: #{_lambda_.12} parent=0 // pred_fallthru
    _
  %v75 = vld [vmem:[#allocation3] sm:$0xff]
  %v76 = vld [vmem:[#allocation3 + $0x8] sm:$0xff]
  %v77 = vld [vmem:[%s2] sm:$0xff]
  %v78 = vld [vmem:[%s2 + $0x8] sm:$0xff]
  %v79 = vld [vmem:[%s2 + $0x10] sm:$0xff]
  %v80 = vld [vmem:[%s2 + $0x18] sm:$0xff]
  %v81 = vld [vmem:[%s2 + $0x20] sm:$0xff]
  %v82 = vld [vmem:[%s2 + $0x28] sm:$0xff]
  %v83 = vld [vmem:[%s2 + $0x30] sm:$0xff]
  %v84 = vld [vmem:[%s2 + $0x38] sm:$0xff]
  %v85 = vld [vmem:[%s2 + $0x40] sm:$0xff]
  %v86 = vld [vmem:[%s2 + $0x48] sm:$0xff]
  %v87 = vld [vmem:[%s2 + $0x50] sm:$0xff]
  %v88 = vld [vmem:[%s2 + $0x58] sm:$0xff]
  %v89 = vld [vmem:[%s2 + $0x60] sm:$0xff]
  %v90 = vld [vmem:[%s2 + $0x68] sm:$0xff]
  %v91 = vld [vmem:[%s2 + $0x70] sm:$0xff]
  %v92 = vld [vmem:[%s2 + $0x78] sm:$0xff]
  %vm93 = vcmask 523264
  %v95 = vsel %vm93, %v75, 0
  %v98 = vsel %vm93, %v76, 0
  %100 = vmatpush.msra.mxu0 0.0
  %101 = vmatpush.msra.mxu0 0.0
  %102 = vmatpush.msra.mxu0 0.0
  %103 = vmatpush.msra.mxu0 0.0
  %104 = vmatpush.msra.mxu0 0.0
  %105 = vmatpush.msra.mxu0 0.0
  %106 = vmatpush.msra.mxu0 0.0
  %107 = vmatpush.msra.mxu0 0.0
  %108 = vmatpush.msra.mxu0 %v91
  %109 = vmatpush.msra.mxu0 %v89
  %110 = vmatpush.msra.mxu0 %v87
  %111 = vmatpush.msra.mxu0 %v85
  %112 = vmatpush.msra.mxu0 %v83
  %113 = vmatpush.msra.mxu0 %v81
  %114 = vmatpush.msra.mxu0 %v79
  %115 = vmatpush.msra.mxu0 %v77
  %116 = vmatmul.f32.gmra.mxu0 %v95
  %v117 = vpop.f32.mrf.mxu0
  %v118 = vadd.f32 0.0, %v117
  %119 = vmatmul.f32.gmra.mxu0 %v98
  %v120 = vpop.f32.mrf.mxu0
  %v121 = vadd.f32 0.0, %v120
  %122 = vdwg.mxu0
  %123 = vmatpush.msra.mxu0 0.0
  %124 = vmatpush.msra.mxu0 0.0
  %125 = vmatpush.msra.mxu0 0.0
  %126 = vmatpush.msra.mxu0 0.0
  %127 = vmatpush.msra.mxu0 0.0
  %128 = vmatpush.msra.mxu0 0.0
  %129 = vmatpush.msra.mxu0 0.0
  %130 = vmatpush.msra.mxu0 0.0
  %131 = vmatpush.msra.mxu0 %v92
  %132 = vmatpush.msra.mxu0 %v90
  %133 = vmatpush.msra.mxu0 %v88
  %134 = vmatpush.msra.mxu0 %v86
  %135 = vmatpush.msra.mxu0 %v84
  %136 = vmatpush.msra.mxu0 %v82
  %137 = vmatpush.msra.mxu0 %v80
  %138 = vmatpush.msra.mxu0 %v78
  %139 = vmatmul.f32.gmra.mxu0 %v95
  %v140 = vpop.f32.mrf.mxu0
  %v141 = vadd.f32 0.0, %v140
  %142 = vmatmul.f32.gmra.mxu0 %v98
  %v143 = vpop.f32.mrf.mxu0
  %v144 = vadd.f32 0.0, %v143
  %145 = vdwg.mxu0
  %s146 = scalar_lea.vmem %s2, 128
  %v147 = vld [vmem:[%s146] sm:$0xff]
  %v148 = vld [vmem:[%s146 + $0x8] sm:$0xff]
  %v149 = vld [vmem:[%s146 + $0x10] sm:$0xff]
  %v150 = vld [vmem:[%s146 + $0x18] sm:$0xff]
  %v151 = vld [vmem:[%s146 + $0x20] sm:$0xff]
  %v152 = vld [vmem:[%s146 + $0x28] sm:$0xff]
  %v153 = vld [vmem:[%s146 + $0x30] sm:$0xff]
  %v154 = vld [vmem:[%s146 + $0x38] sm:$0xff]
  %v155 = vld [vmem:[%s146 + $0x40] sm:$0xff]
  %v156 = vld [vmem:[%s146 + $0x48] sm:$0xff]
  %v157 = vld [vmem:[%s146 + $0x50] sm:$0xff]
  %v158 = vld [vmem:[%s146 + $0x58] sm:$0xff]
  %v159 = vld [vmem:[%s146 + $0x60] sm:$0xff]
  %v160 = vld [vmem:[%s146 + $0x68] sm:$0xff]
  %v161 = vld [vmem:[%s146 + $0x70] sm:$0xff]
  %v162 = vld [vmem:[%s146 + $0x78] sm:$0xff]
  %163 = vmatpush.msra.mxu0 0.0
  %164 = vmatpush.msra.mxu0 0.0
  %165 = vmatpush.msra.mxu0 0.0
  %166 = vmatpush.msra.mxu0 0.0
  %167 = vmatpush.msra.mxu0 0.0
  %168 = vmatpush.msra.mxu0 0.0
  %169 = vmatpush.msra.mxu0 0.0
  %170 = vmatpush.msra.mxu0 0.0
  %171 = vmatpush.msra.mxu0 %v161
  %172 = vmatpush.msra.mxu0 %v159
  %173 = vmatpush.msra.mxu0 %v157
  %174 = vmatpush.msra.mxu0 %v155
  %175 = vmatpush.msra.mxu0 %v153
  %176 = vmatpush.msra.mxu0 %v151
  %177 = vmatpush.msra.mxu0 %v149
  %178 = vmatpush.msra.mxu0 %v147
  %179 = vmatmul.f32.gmra.mxu0 %v95
  %v180 = vpop.f32.mrf.mxu0
  %v181 = vadd.f32 0.0, %v180
  %182 = vmatmul.f32.gmra.mxu0 %v98
  %v183 = vpop.f32.mrf.mxu0
  %v184 = vadd.f32 0.0, %v183
  %185 = vdwg.mxu0
  %186 = vmatpush.msra.mxu0 0.0
  %187 = vmatpush.msra.mxu0 0.0
  %188 = vmatpush.msra.mxu0 0.0
  %189 = vmatpush.msra.mxu0 0.0
  %190 = vmatpush.msra.mxu0 0.0
  %191 = vmatpush.msra.mxu0 0.0
  %192 = vmatpush.msra.mxu0 0.0
  %193 = vmatpush.msra.mxu0 0.0
  %194 = vmatpush.msra.mxu0 %v162
  %195 = vmatpush.msra.mxu0 %v160
  %196 = vmatpush.msra.mxu0 %v158
  %197 = vmatpush.msra.mxu0 %v156
  %198 = vmatpush.msra.mxu0 %v154
  %199 = vmatpush.msra.mxu0 %v152
  %200 = vmatpush.msra.mxu0 %v150
  %201 = vmatpush.msra.mxu0 %v148
  %202 = vmatmul.f32.gmra.mxu0 %v95
  %v203 = vpop.f32.mrf.mxu0
  %v204 = vadd.f32 0.0, %v203
  %205 = vmatmul.f32.gmra.mxu0 %v98
  %v206 = vpop.f32.mrf.mxu0
  %v207 = vadd.f32 0.0, %v206
  %208 = vdwg.mxu0
  %v209 = vxor.u32 %v118, 2147483648
  %v210 = vxor.u32 %v141, 2147483648
  %v211 = vxor.u32 %v121, 2147483648
  %v212 = vxor.u32 %v144, 2147483648
  %v213 = vmul.f32 %v209, 1.442695
  %v214 = vpow.pop %v213
  %v215 = vmul.f32 %v210, 1.442695
  %v216 = vpow.pop %v215
  %v217 = vmul.f32 %v211, 1.442695
  %v218 = vpow.pop %v217
  %v219 = vmul.f32 %v212, 1.442695
  %v220 = vpow.pop %v219
  %v221 = vadd.f32 %v214, 1.0
  %v222 = vadd.f32 %v216, 1.0
  %v223 = vadd.f32 %v218, 1.0
  %v224 = vadd.f32 %v220, 1.0
  %v225 = vrcp.pop %v221
  %v226 = vmul.f32 %v221, %v225
  %v227 = vsub.f32 1.0, %v226
  %v228 = vmul.f32 %v225, %v227
  %v229 = vadd.f32 %v225, %v228
  %vm230 = vweird.f32 %v221
  %vm231 = vweird.f32 %v225
  %vm232 = vmor %vm230, %vm231
  %v233 = vsel %vm232, %v225, %v229
  %v234 = vand.u32 2147483647, %v221
  %vm235 = vcmp.eq.f32.partialorder %v234, 8.507059e+37
  %v236 = vand.u32 %v221, 2147483648
  %v237 = vor.u32 1.1754944e-38, %v236
  %v238 = vsel %vm235, %v237, %v233
  %v239 = vmul.f32 1.0, %v238
  %v240 = vrcp.pop %v222
  %v241 = vmul.f32 %v222, %v240
  %v242 = vsub.f32 1.0, %v241
  %v243 = vmul.f32 %v240, %v242
  %v244 = vadd.f32 %v240, %v243
  %vm245 = vweird.f32 %v222
  %vm246 = vweird.f32 %v240
  %vm247 = vmor %vm245, %vm246
  %v248 = vsel %vm247, %v240, %v244
  %v249 = vand.u32 2147483647, %v222
  %vm250 = vcmp.eq.f32.partialorder %v249, 8.507059e+37
  %v251 = vand.u32 %v222, 2147483648
  %v252 = vor.u32 1.1754944e-38, %v251
  %v253 = vsel %vm250, %v252, %v248
  %v254 = vmul.f32 1.0, %v253
  %v255 = vrcp.pop %v223
  %v256 = vmul.f32 %v223, %v255
  %v257 = vsub.f32 1.0, %v256
  %v258 = vmul.f32 %v255, %v257
  %v259 = vadd.f32 %v255, %v258
  %vm260 = vweird.f32 %v223
  %vm261 = vweird.f32 %v255
  %vm262 = vmor %vm260, %vm261
  %v263 = vsel %vm262, %v255, %v259
  %v264 = vand.u32 2147483647, %v223
  %vm265 = vcmp.eq.f32.partialorder %v264, 8.507059e+37
  %v266 = vand.u32 %v223, 2147483648
  %v267 = vor.u32 1.1754944e-38, %v266
  %v268 = vsel %vm265, %v267, %v263
  %v269 = vmul.f32 1.0, %v268
  %v270 = vrcp.pop %v224
  %v271 = vmul.f32 %v224, %v270
  %v272 = vsub.f32 1.0, %v271
  %v273 = vmul.f32 %v270, %v272
  %v274 = vadd.f32 %v270, %v273
  %vm275 = vweird.f32 %v224
  %vm276 = vweird.f32 %v270
  %vm277 = vmor %vm275, %vm276
  %v278 = vsel %vm277, %v270, %v274
  %v279 = vand.u32 2147483647, %v224
  %vm280 = vcmp.eq.f32.partialorder %v279, 8.507059e+37
  %v281 = vand.u32 %v224, 2147483648
  %v282 = vor.u32 1.1754944e-38, %v281
  %v283 = vsel %vm280, %v282, %v278
  %v284 = vmul.f32 1.0, %v283
  %v285 = vmul.f32 %v118, %v239
  %v286 = vmul.f32 %v141, %v254
  %v287 = vmul.f32 %v121, %v269
  %v288 = vmul.f32 %v144, %v284
  %v289 = vld [vmem:[#allocation2] sm:$0xff]
  %v290 = vld [vmem:[#allocation2 + $0x8] sm:$0xff]
  %v291 = vmul.f32 %v285, %v181
  %v292 = vmul.f32 %v286, %v204
  %v293 = vmul.f32 %v287, %v184
  %v294 = vmul.f32 %v288, %v207
  %v295 = vld [vmem:[%s3] sm:$0xff]
  %v296 = vld [vmem:[%s3 + $0x8] sm:$0xff]
  %v297 = vld [vmem:[%s3 + $0x10] sm:$0xff]
  %v298 = vld [vmem:[%s3 + $0x18] sm:$0xff]
  %v299 = vld [vmem:[%s3 + $0x20] sm:$0xff]
  %v300 = vld [vmem:[%s3 + $0x28] sm:$0xff]
  %v301 = vld [vmem:[%s3 + $0x30] sm:$0xff]
  %v302 = vld [vmem:[%s3 + $0x38] sm:$0xff]
  %v303 = vld [vmem:[%s3 + $0x40] sm:$0xff]
  %v304 = vld [vmem:[%s3 + $0x48] sm:$0xff]
  %v305 = vld [vmem:[%s3 + $0x50] sm:$0xff]
  %v306 = vld [vmem:[%s3 + $0x58] sm:$0xff]
  %v307 = vld [vmem:[%s3 + $0x60] sm:$0xff]
  %v308 = vld [vmem:[%s3 + $0x68] sm:$0xff]
  %v309 = vld [vmem:[%s3 + $0x70] sm:$0xff]
  %v310 = vld [vmem:[%s3 + $0x78] sm:$0xff]
  %v311 = vld [vmem:[%s3 + $0x80] sm:$0xff]
  %v312 = vld [vmem:[%s3 + $0x88] sm:$0xff]
  %v313 = vld [vmem:[%s3 + $0x90] sm:$0xff]
  %v314 = vld [vmem:[%s3 + $0x98] sm:$0xff]
  %v315 = vld [vmem:[%s3 + $0xa0] sm:$0xff]
  %v316 = vld [vmem:[%s3 + $0xa8] sm:$0xff]
  %v317 = vld [vmem:[%s3 + $0xb0] sm:$0xff]
  %v318 = vld [vmem:[%s3 + $0xb8] sm:$0xff]
  %v320 = vsel %vm93, %v292, 0
  %v323 = vsel %vm93, %v294, 0
  %325 = vmatpush.msra.mxu0 %v310
  %326 = vmatpush.msra.mxu0 %v309
  %327 = vmatpush.msra.mxu0 %v308
  %328 = vmatpush.msra.mxu0 %v307
  %329 = vmatpush.msra.mxu0 %v306
  %330 = vmatpush.msra.mxu0 %v305
  %331 = vmatpush.msra.mxu0 %v304
  %332 = vmatpush.msra.mxu0 %v303
  %333 = vmatpush.msra.mxu0 %v302
  %334 = vmatpush.msra.mxu0 %v301
  %335 = vmatpush.msra.mxu0 %v300
  %336 = vmatpush.msra.mxu0 %v299
  %337 = vmatpush.msra.mxu0 %v298
  %338 = vmatpush.msra.mxu0 %v297
  %339 = vmatpush.msra.mxu0 %v296
  %340 = vmatpush.msra.mxu0 %v295
  %341 = vmatmul.f32.gmra.mxu0 %v291
  %v342 = vpop.f32.mrf.mxu0
  %v343 = vadd.f32 0.0, %v342
  %344 = vmatmul.f32.gmra.mxu0 %v293
  %v345 = vpop.f32.mrf.mxu0
  %v346 = vadd.f32 0.0, %v345
  %347 = vdwg.mxu0
  %348 = vmatpush.msra.mxu0 0.0
  %349 = vmatpush.msra.mxu0 0.0
  %350 = vmatpush.msra.mxu0 0.0
  %351 = vmatpush.msra.mxu0 0.0
  %352 = vmatpush.msra.mxu0 0.0
  %353 = vmatpush.msra.mxu0 0.0
  %354 = vmatpush.msra.mxu0 0.0
  %355 = vmatpush.msra.mxu0 0.0
  %356 = vmatpush.msra.mxu0 %v318
  %357 = vmatpush.msra.mxu0 %v317
  %358 = vmatpush.msra.mxu0 %v316
  %359 = vmatpush.msra.mxu0 %v315
  %360 = vmatpush.msra.mxu0 %v314
  %361 = vmatpush.msra.mxu0 %v313
  %362 = vmatpush.msra.mxu0 %v312
  %363 = vmatpush.msra.mxu0 %v311
  %364 = vmatmul.f32.gmra.mxu0 %v320
  %v365 = vpop.f32.mrf.mxu0
  %v366 = vadd.f32 %v343, %v365
  %367 = vmatmul.f32.gmra.mxu0 %v323
  %v368 = vpop.f32.mrf.mxu0
  %v369 = vadd.f32 %v346, %v368
  %370 = vdwg.mxu0
  %v371 = vadd.f32 %v289, %v366
  %v372 = vadd.f32 %v290, %v369
  %373 = vst.msk [vmem:[#allocation2] sm:$0xff] %vm93, %v371
  %374 = vst.msk [vmem:[#allocation2 + $0x8] sm:$0xff] %vm93, %v372
  // Predicated region
  $region22: #{_lambda_.12} parent=0 // pred_check
    %p375 = pneg %p17
  $region23: #{_lambda_.12} parent=0 // pred_check_branch
    %377 = sbr.rel (%p375) target = $region25
  $region24: #{_lambda_.12} parent=0 // pred_region
    %v378 = vld [vmem:[#allocation2] sm:$0xff]
    %v379 = vld [vmem:[#allocation2 + $0x8] sm:$0xff]
    %v380 = vmul.f32 %v378, 0.22
    %v381 = vmul.f32 %v379, 0.22
    %v382 = vld [vmem:[%s0] sm:$0xff]
    %v383 = vld [vmem:[%s0 + $0x8] sm:$0xff]
    %v384 = vadd.f32 %v380, %v382
    %v385 = vadd.f32 %v381, %v383
    %386 = vst.msk [vmem:[%s4] sm:$0xff] %vm93, %v384
    %387 = vst.msk [vmem:[%s4 + $0x8] sm:$0xff] %vm93, %v385
  $region25: #{_lambda_.12} parent=0 // pred_fallthru
    _
  // Predicated region
  $region26: #{_lambda_.12} parent=0 // pred_check
    _
  $region27: #{_lambda_.12} parent=0 // pred_check_branch
    %389 = sbr.rel (0) target = $region29
  $region28: #{_lambda_.12} parent=0 // pred_region
    _
  $region29: #{_lambda_.12} parent=0 // pred_fallthru
    _
  // Predicated region
  $region30: #{_lambda_.12} parent=0 // pred_check
    _
  $region31: #{_lambda_.12} parent=0 // pred_check_branch
    %391 = sbr.rel (0) target = $region33
  $region32: #{_lambda_.12} parent=0 // pred_region
    _
  $region33: #{_lambda_.12} parent=0 // pred_fallthru
    _

// kernel: _lambda_.17
$region0: #{_lambda_.17}
  #allocation0 [shape = 'u32[]', space=smem, size = 0x4, offset = 0x4, fixed_abs, tag = 'smem constant byte address 0x4 - core index']
  #allocation1 [shape = 'u32[72,128]{1,0:T(1,128)}', space=vmem, size = 0x9000, scoped, tag = 'internal scratch']
  #allocation2 [shape = 'f32[16,64]{1,0:T(8,128)}', space=vmem, size = 0x2000, scoped, tag = 'scratch operand']
  %s0 = inlined_call_operand.vmem [shape: f32[16,64], index: 0, kind: input, shape index: {}]
  %s1 = inlined_call_operand.vmem [shape: f32[1,64], index: 1, kind: input, shape index: {}]
  %s2 = inlined_call_operand.vmem [shape: f32[64,256], index: 2, kind: input, shape index: {}]
  %s3 = inlined_call_operand.hbm [shape: f32[16,256], index: 3, kind: output, shape index: {}]
  %s4 = sld [smem:[#allocation0]]
  $region26: #{_lambda_.17} parent=0
    _
  %s6 = ssub.s32 1, %s4
  %s7 = scalar_select 0, %s6, %s4
  $region1: #{_lambda_.17} parent=0
    #allocation3 [shape = 'u8[16384]{0}', space=vmem, size = 0x4000, scoped, tag = 'output window, operand 0, single buffered']
    #allocation4 [shape = 's32[1]{0}', space=sflag, size = 0x4, scoped, tag = 'scoped memory for _lambda_.17']
    %8 = vsyncpa [#allocation4], 0
    // Predicated region
    $region2: #{_lambda_.17} parent=1 // pred_check
      _
    $region3: #{_lambda_.17} parent=1 // pred_check_branch
      %10 = sbr.rel (0) target = $region5
    $region4: #{_lambda_.17} parent=1 // pred_region
      _
    $region5: #{_lambda_.17} parent=1 // pred_fallthru
      _
    // Predicated region
    $region6: #{_lambda_.17} parent=1 // pred_check
      _
    $region7: #{_lambda_.17} parent=1 // pred_check_branch
      %12 = sbr.rel (0) target = $region9
    $region8: #{_lambda_.17} parent=1 // pred_region
      _
    $region9: #{_lambda_.17} parent=1 // pred_fallthru
      _
    // Predicated region
    $region10: #{_lambda_.17} parent=1 // pred_check
      _
    $region11: #{_lambda_.17} parent=1 // pred_check_branch
      %14 = sbr.rel (0) target = $region13
    $region12: #{_lambda_.17} parent=1 // pred_region
      _
    $region13: #{_lambda_.17} parent=1 // pred_fallthru
      _
    %p15 = scmp.eq.s32.totalorder 0, 0
    // Predicated region
    $region14: #{_lambda_.17} parent=1 // pred_check
      %p16 = pneg %p15
    $region15: #{_lambda_.17} parent=1 // pred_check_branch
      %18 = sbr.rel (%p16) target = $region17
    $region16: #{_lambda_.17} parent=1 // pred_region
      %v19 = vld [vmem:[%s0] sm:$0xff]
      %v20 = vld [vmem:[%s0 + $0x8] sm:$0xff]
      %v21 = vmul.f32 %v19, %v19
      %v22 = vmul.f32 %v20, %v20
      %vm23 = vcmask 523264
      %v24 = vsel %vm23, %v21, 0.0
      %25 = vadd.xlane.f32.xlu0 %v24
      %v26 = vpop.xlane.xlu0 %25
      %v27 = vsel %vm23, %v22, 0.0
      %28 = vadd.xlane.f32.xlu0 %v27
      %v29 = vpop.xlane.xlu0 %28
      %v30 = vrcp.pop 64.0
      %v31 = vmul.f32 64.0, %v30
      %v32 = vsub.f32 1.0, %v31
      %v33 = vmul.f32 %v30, %v32
      %v34 = vadd.f32 %v30, %v33
      %vm35 = vweird.f32 %v30
      %v36 = vsel %vm35, %v30, %v34
      %v37 = vmul.f32 %v26, %v36
      %v38 = vmul.f32 %v29, %v36
      %v39 = vadd.f32 %v37, 1e-05
      %v40 = vadd.f32 %v38, 1e-05
      %v41 = vrsqrt.pop %v39
      %v42 = vmul.f32 %v41, %v39
      %v43 = vmul.f32 %v42, %v41
      %v44 = vmul.f32 0.5, %v43
      %v45 = vsub.f32 1.5, %v44
      %v46 = vmul.f32 %v41, %v45
      %vm47 = vweird.f32 %v39
      %vm48 = vweird.f32 %v41
      %vm49 = vmor %vm47, %vm48
      %v50 = vsel %vm49, %v41, %v46
      %v51 = vrsqrt.pop %v40
      %v52 = vmul.f32 %v51, %v40
      %v53 = vmul.f32 %v52, %v51
      %v54 = vmul.f32 0.5, %v53
      %v55 = vsub.f32 1.5, %v54
      %v56 = vmul.f32 %v51, %v55
      %vm57 = vweird.f32 %v40
      %vm58 = vweird.f32 %v51
      %vm59 = vmor %vm57, %vm58
      %v60 = vsel %vm59, %v51, %v56
      %v61 = vmul.f32 %v19, %v50
      %v62 = vmul.f32 %v20, %v60
      %v63 = vld [vmem:[%s1] sm:$0x1]
      %v65 = vperm.slane %v63, 0
      %v67 = vmul.f32 %v61, %v65
      %v68 = vmul.f32 %v62, %v65
      %69 = vst.msk [vmem:[#allocation2] sm:$0xff] %vm23, %v67
      %70 = vst.msk [vmem:[#allocation2 + $0x8] sm:$0xff] %vm23, %v68
    $region17: #{_lambda_.17} parent=1 // pred_fallthru
      _
    %v71 = vld [vmem:[#allocation2] sm:$0xff]
    %v72 = vld [vmem:[#allocation2 + $0x8] sm:$0xff]
    %v73 = vld [vmem:[%s2] sm:$0xff]
    %v74 = vld [vmem:[%s2 + $0x8] sm:$0xff]
    %v75 = vld [vmem:[%s2 + $0x10] sm:$0xff]
    %v76 = vld [vmem:[%s2 + $0x18] sm:$0xff]
    %v77 = vld [vmem:[%s2 + $0x20] sm:$0xff]
    %v78 = vld [vmem:[%s2 + $0x28] sm:$0xff]
    %v79 = vld [vmem:[%s2 + $0x30] sm:$0xff]
    %v80 = vld [vmem:[%s2 + $0x38] sm:$0xff]
    %v81 = vld [vmem:[%s2 + $0x40] sm:$0xff]
    %v82 = vld [vmem:[%s2 + $0x48] sm:$0xff]
    %v83 = vld [vmem:[%s2 + $0x50] sm:$0xff]
    %v84 = vld [vmem:[%s2 + $0x58] sm:$0xff]
    %v85 = vld [vmem:[%s2 + $0x60] sm:$0xff]
    %v86 = vld [vmem:[%s2 + $0x68] sm:$0xff]
    %v87 = vld [vmem:[%s2 + $0x70] sm:$0xff]
    %v88 = vld [vmem:[%s2 + $0x78] sm:$0xff]
    %vm89 = vcmask 523264
    %v91 = vsel %vm89, %v71, 0
    %v94 = vsel %vm89, %v72, 0
    %96 = vmatpush.msra.mxu0 0.0
    %97 = vmatpush.msra.mxu0 0.0
    %98 = vmatpush.msra.mxu0 0.0
    %99 = vmatpush.msra.mxu0 0.0
    %100 = vmatpush.msra.mxu0 0.0
    %101 = vmatpush.msra.mxu0 0.0
    %102 = vmatpush.msra.mxu0 0.0
    %103 = vmatpush.msra.mxu0 0.0
    %104 = vmatpush.msra.mxu0 %v87
    %105 = vmatpush.msra.mxu0 %v85
    %106 = vmatpush.msra.mxu0 %v83
    %107 = vmatpush.msra.mxu0 %v81
    %108 = vmatpush.msra.mxu0 %v79
    %109 = vmatpush.msra.mxu0 %v77
    %110 = vmatpush.msra.mxu0 %v75
    %111 = vmatpush.msra.mxu0 %v73
    %112 = vmatmul.f32.gmra.mxu0 %v91
    %v113 = vpop.f32.mrf.mxu0
    %v114 = vadd.f32 0.0, %v113
    %115 = vmatmul.f32.gmra.mxu0 %v94
    %v116 = vpop.f32.mrf.mxu0
    %v117 = vadd.f32 0.0, %v116
    %118 = vdwg.mxu0
    %119 = vmatpush.msra.mxu0 0.0
    %120 = vmatpush.msra.mxu0 0.0
    %121 = vmatpush.msra.mxu0 0.0
    %122 = vmatpush.msra.mxu0 0.0
    %123 = vmatpush.msra.mxu0 0.0
    %124 = vmatpush.msra.mxu0 0.0
    %125 = vmatpush.msra.mxu0 0.0
    %126 = vmatpush.msra.mxu0 0.0
    %127 = vmatpush.msra.mxu0 %v88
    %128 = vmatpush.msra.mxu0 %v86
    %129 = vmatpush.msra.mxu0 %v84
    %130 = vmatpush.msra.mxu0 %v82
    %131 = vmatpush.msra.mxu0 %v80
    %132 = vmatpush.msra.mxu0 %v78
    %133 = vmatpush.msra.mxu0 %v76
    %134 = vmatpush.msra.mxu0 %v74
    %135 = vmatmul.f32.gmra.mxu0 %v91
    %v136 = vpop.f32.mrf.mxu0
    %v137 = vadd.f32 0.0, %v136
    %138 = vmatmul.f32.gmra.mxu0 %v94
    %v139 = vpop.f32.mrf.mxu0
    %v140 = vadd.f32 0.0, %v139
    %141 = vdwg.mxu0
    %v142 = vmul.f32 %v114, 0.125
    %v143 = vmul.f32 %v137, 0.125
    %v144 = vmul.f32 %v117, 0.125
    %v145 = vmul.f32 %v140, 0.125
    %146 = vst [vmem:[#allocation3] sm:$0xff] %v142
    %147 = vst [vmem:[#allocation3 + $0x8] sm:$0xff] %v143
    %148 = vst [vmem:[#allocation3 + $0x10] sm:$0xff] %v144
    %149 = vst [vmem:[#allocation3 + $0x18] sm:$0xff] %v145
    // Predicated region
    $region18: #{_lambda_.17} parent=1 // pred_check
      _
    $region19: #{_lambda_.17} parent=1 // pred_check_branch
      %151 = sbr.rel (0) target = $region21
    $region20: #{_lambda_.17} parent=1 // pred_region
      %153 = vsyncadd [#allocation4], 0
      %s154 = sshll.u32 [#allocation3], 4
      %s155 = int_to_ptr.vmem [resolvable:$true] %s154
      %s156 = sshll.u32 %s3, 4
      %s157 = int_to_ptr.hbm [resolvable:$true] %s156
      %162 = dma.vmem_to_hbm [thread:$0]  %s155, 512, %s157, [#allocation4], 256, 256, 16
    $region21: #{_lambda_.17} parent=1 // pred_fallthru
      _
    // Predicated region
    $region22: #{_lambda_.17} parent=1 // pred_check
      _
    $region23: #{_lambda_.17} parent=1 // pred_check_branch
      %164 = sbr.rel (0) target = $region25
    $region24: #{_lambda_.17} parent=1 // pred_region
      %166 = dma.done [#allocation4], 512
    $region25: #{_lambda_.17} parent=1 // pred_fallthru
      _
    %167 = vsyncpa [#allocation4], 1

</llo_original>
